<compile_context>
chip_gen: v7x
topology: tpu7x:2x2x1
jax: 0.10.0
libtpu: 0.0.40
codegen_flags: <defaults>
</compile_context>

<pallas_src>
import jax
import jax.numpy as jnp
from jax import lax
from jax.experimental import pallas as pl
from jax.experimental.pallas import tpu as pltpu


# ----------------------------------------------------------------------------
# Parameter init (deterministic, PyTorch-shaped weights)
# ----------------------------------------------------------------------------
def init_params(key, dim, kernel, n_classes):
    p = kernel // 2
    kh = p + 1
    D2 = 2 * dim
    ks = jax.random.split(key, 10)

    def u(k, shape, fan_in):
        bound = 1.0 / jnp.sqrt(fan_in)
        return jax.random.uniform(k, shape, jnp.float32, -bound, bound)

    return {
        # PyTorch Conv2d weight layout: (out, in, kh, kw)
        "wv": u(ks[0], (D2, dim, kh, kernel), dim * kh * kernel),
        "bv": u(ks[1], (D2,), dim * kh * kernel),
        "wh": u(ks[2], (D2, dim, 1, kh), dim * kh),
        "bh": u(ks[3], (D2,), dim * kh),
        "wv2h": u(ks[4], (D2, D2, 1, 1), D2),
        "bv2h": u(ks[5], (D2,), D2),
        "whr": u(ks[6], (dim, dim, 1, 1), dim),
        "bhr": u(ks[7], (dim,), dim),
        "emb_table": jax.random.normal(ks[8], (n_classes, D2), jnp.float32),
    }


def _masked_weights(params, mask_type):
    wv, wh = params["wv"], params["wh"]
    if mask_type == "A":
        # make_causal(): zero last kernel row of vert, last kernel col of horiz
        wv = wv.at[:, :, -1, :].set(0.0)
        wh = wh.at[:, :, :, -1].set(0.0)
    return wv, wh


# ----------------------------------------------------------------------------
# Pallas kernel: one batch element per grid step, taps built in-kernel.
# ----------------------------------------------------------------------------
def _make_kernel(D, kh, k, Wp, L, residual):
    """D=dim, kh=k//2+1, k=kernel, Wp=W+2p (padded width), L=lane extent."""
    p = kh - 1
    KV = kh * k
    f32 = jnp.float32

    def kernel_fn(xv_ref, xh_ref, bv_ref, bh_ref,
                  wv_ref, wh_ref, wv2h_ref, whr_ref, bhr_ref, out_ref):
        # ---- Vertical masked conv: kh*k taps as shifted lane slices of the
        # resident padded slab; one small matmul per tap, f32 accumulation.
        acc_v = jnp.dot(wv_ref[0], xv_ref[:, 0:L], preferred_element_type=f32)
        for t in range(1, KV):
            r, c = divmod(t, k)
            off = r * Wp + c                      # static Python int offset
            acc_v = acc_v + jnp.dot(wv_ref[t], xv_ref[:, off:off + L],
                                    preferred_element_type=f32)

        # ---- Horizontal masked conv: row-only kernel -> pure lane shifts.
        acc_h = jnp.dot(wh_ref[0], xh_ref[:, 0:L], preferred_element_type=f32)
        for c in range(1, kh):
            acc_h = acc_h + jnp.dot(wh_ref[c], xh_ref[:, c:c + L],
                                    preferred_element_type=f32)

        # ---- 1x1 vert->horiz (its bias and wv2h@bv are folded into bh_ref).
        v2h = jnp.dot(wv2h_ref[...], acc_v, preferred_element_type=f32)

        # ---- Per-batch bias + class embedding: tiny (2D,1) lane broadcasts.
        in_v = acc_v + bv_ref[...]
        in_h = v2h + acc_h + bh_ref[...]

        # ---- Gated activation: tanh(first half) * sigmoid(second half).
        # sigmoid(y) == 0.5*(1 + tanh(y/2)) keeps the whole gate on the EUP.
        # NOTE: the [:D]/[D:] splits are sub-(8,128)-tile only at toy D=4;
        # at production D (multiple of 8) they are free tile-aligned views.
        def gate(z):
            return jnp.tanh(z[:D, :]) * (0.5 * (1.0 + jnp.tanh(0.5 * z[D:, :])))

        out_v = gate(in_v)
        g_h = gate(in_h)

        # ---- 1x1 residual conv on the horizontal path.
        out_h = jnp.dot(whr_ref[...], g_h, preferred_element_type=f32) + bhr_ref[...]
        if residual:
            # x_h itself is the tap at column offset p of the resident slab.
            out_h = out_h + xh_ref[:, p:p + L].astype(f32)

        # ---- Single packed (2D, L) output block (out_v rows, then out_h rows)
        # -> one 8-sublane-aligned, lane-dense writeback DMA per grid step.
        out_ref[:D, :] = out_v
        out_ref[D:, :] = out_h

    return kernel_fn


# ----------------------------------------------------------------------------
# Wrapper: NCHW in, NCHW out.  Padding / bias folding / crop are XLA glue.
# ----------------------------------------------------------------------------
def gated_masked_conv2d_pallas(params, x_v, x_h, class_condition, *,
                               mask_type="A", kernel=3, residual=True,
                               mxu_dtype=jnp.float32):
    x_v = x_v.astype(jnp.float32)
    x_h = x_h.astype(jnp.float32)
    N, C, H, W = x_v.shape
    assert x_h.shape == (N, C, H, W)
    # The module crops h_vert to x_v.size(-1) and h_horiz to x_h.size(-2);
    # this is only shape-consistent for square feature maps.
    assert H == W, "GatedMaskedConv2d assumes square feature maps (H == W)"
    D, D2 = C, 2 * C
    p = kernel // 2
    kh = p + 1
    KV = kh * kernel

    Wp = W + 2 * p                       # padded width == wide compute domain
    Lout = H * Wp                        # valid wide-output lanes per image
    L = ((Lout + 127) // 128) * 128      # lane-dense compute / output extent

    # ---- Per-tap weight stacks; mask 'A' zeroes the causal taps.
    wv, wh = _masked_weights(params, mask_type)
    wv_taps = jnp.transpose(wv, (2, 3, 0, 1)).reshape(KV, D2, C)   # (kh*k,2D,C)
    wh_taps = jnp.transpose(wh[:, :, 0, :], (2, 0, 1))             # (kh, 2D, C)
    wv2h = params["wv2h"][:, :, 0, 0]                              # (2D, 2D)
    whr = params["whr"][:, :, 0, 0]                                # (D, D)
    bhr = params["bhr"].reshape(D, 1).astype(jnp.float32)

    # ---- Flat, guard-padded activation slabs (C sublanes, flat spatial lanes).
    # Vertical slab: top p rows + p cols each side; front/back lane guards so
    # every tap slice [r*Wp+c, r*Wp+c+L) stays in bounds (guards read as 0 and
    # only touch wide-output columns that get cropped below).
    Lv = L + p * Wp + 2 * p
    xv_p = jnp.pad(x_v, ((0, 0), (0, 0), (p, 0), (p, p)))          # (N,C,H+p,Wp)
    xv_slab = jnp.pad(xv_p.reshape(N, C, (H + p) * Wp),
                      ((0, 0), (0, 0), (p, Lv - p - (H + p) * Wp)))
    # Horizontal slab: p cols each side, front guard of p lanes.
    Lh = L + p
    xh_p = jnp.pad(x_h, ((0, 0), (0, 0), (0, 0), (p, p)))          # (N,C,H,Wp)
    xh_slab = jnp.pad(xh_p.reshape(N, C, H * Wp),
                      ((0, 0), (0, 0), (p, Lh - p - H * Wp)))

    # ---- Fold conv biases + class embedding (+ wv2h @ bv for the horizontal
    # path) into per-batch (2D, 1) bias columns -- no broadcast slabs in HBM.
    emb = params["emb_table"][class_condition]                     # (N, 2D)
    bias_v = (params["bv"][None, :] + emb).reshape(N, D2, 1)
    bias_h = (params["bh"][None, :] + params["bv2h"][None, :]
              + (wv2h @ params["bv"])[None, :] + emb).reshape(N, D2, 1)

    # Optional bf16 MXU operands (accumulation stays f32 in-kernel).  The toy
    # test keeps f32 to stay well inside the 1e-4 tolerance.
    xv_slab = xv_slab.astype(mxu_dtype)
    xh_slab = xh_slab.astype(mxu_dtype)
    wv_taps = wv_taps.astype(mxu_dtype)
    wh_taps = wh_taps.astype(mxu_dtype)
    wv2h_c = wv2h.astype(mxu_dtype)
    whr_c = whr.astype(mxu_dtype)

    x_map = lambda n: (n, 0, 0)          # per-batch blocks
    w3_map = lambda n: (0, 0, 0)         # resident weights (constant index)
    w2_map = lambda n: (0, 0)

    grid_spec = pltpu.PrefetchScalarGridSpec(
        num_scalar_prefetch=0,
        grid=(N,),
        in_specs=[
            pl.BlockSpec((None, C, Lv), x_map),      # padded x_v slab
            pl.BlockSpec((None, C, Lh), x_map),      # padded x_h slab
            pl.BlockSpec((None, D2, 1), x_map),      # folded bias_v (per batch)
            pl.BlockSpec((None, D2, 1), x_map),      # folded bias_h (per batch)
            pl.BlockSpec((KV, D2, C), w3_map),       # vertical tap weights
            pl.BlockSpec((kh, D2, C), w3_map),       # horizontal tap weights
            pl.BlockSpec((D2, D2), w2_map),          # vert_to_horiz 1x1
            pl.BlockSpec((D, D), w2_map),            # horiz_resid 1x1
            pl.BlockSpec((D, 1), w2_map),            # horiz_resid bias
        ],
        out_specs=pl.BlockSpec((None, 2 * D, L), x_map),
    )

    packed = pl.pallas_call(
        _make_kernel(D, kh, kernel, Wp, L, residual),
        out_shape=jax.ShapeDtypeStruct((N, 2 * D, L), jnp.float32),
        grid_spec=grid_spec,
        compiler_params=pltpu.CompilerParams(
            dimension_semantics=("parallel",),
            vmem_limit_bytes=32 * 1024 * 1024),
    )(xv_slab, xh_slab, bias_v, bias_h,
      wv_taps, wh_taps, wv2h_c, whr_c, bhr)

    # Crop the wide / lane-padded compute domain back to NCHW (cheap XLA glue).
    packed = packed[:, :, :Lout].reshape(N, 2 * D, H, Wp)[:, :, :, p:p + W]
    out_v = packed[:, :D]
    out_h = packed[:, D:]
    return out_v, out_h


# ----------------------------------------------------------------------------
# Pure-JAX reference (NCHW), mirrors the PyTorch forward exactly
# ----------------------------------------------------------------------------
def gated_masked_conv2d_ref(params, x_v, x_h, class_condition,
                            *, mask_type="A", kernel=3, residual=True):
    x_v = x_v.astype(jnp.float32)
    x_h = x_h.astype(jnp.float32)
    N, C, H, W = x_v.shape
    D, D2 = C, 2 * C
    p = kernel // 2

    wv, wh = _masked_weights(params, mask_type)
    dn = ("NCHW", "OIHW", "NCHW")

    h_vert = lax.conv_general_dilated(
        x_v, wv, (1, 1), [(p, p), (p, p)], dimension_numbers=dn)
    h_vert = h_vert + params["bv"].reshape(1, D2, 1, 1)
    h_vert = h_vert[:, :, :H, :]        # module crops to size(-1); H == W here

    h_horiz = lax.conv_general_dilated(
        x_h, wh, (1, 1), [(0, 0), (p, p)], dimension_numbers=dn)
    h_horiz = h_horiz + params["bh"].reshape(1, D2, 1, 1)
    h_horiz = h_horiz[:, :, :, :W]

    wv2h = params["wv2h"][:, :, 0, 0]
    whr = params["whr"][:, :, 0, 0]
    v2h = jnp.einsum("oc,nchw->nohw", wv2h, h_vert) \
        + params["bv2h"].reshape(1, D2, 1, 1)

    emb = params["emb_table"][class_condition][:, :, None, None]   # (N, 2D, 1, 1)
    in_v = h_vert + emb
    in_h = v2h + h_horiz + emb

    def gate(t):
        return jnp.tanh(t[:, :D]) * jax.nn.sigmoid(t[:, D:])

    out_v = gate(in_v)
    gate_h = gate(in_h)
    out_h = jnp.einsum("oc,nchw->nohw", whr, gate_h) \
        + params["bhr"].reshape(1, D, 1, 1)
    if residual:
        out_h = out_h + x_h
    return out_v, out_h


# ----------------------------------------------------------------------------
if __name__ == "__main__":
    N, dim, H, W = 2, 4, 16, 16
    kernel = 3
    n_classes = 10

    key = jax.random.PRNGKey(0)
    kp, kx, ky = jax.random.split(key, 3)

    params = init_params(kp, dim, kernel, n_classes)
    x_v = jax.random.normal(kx, (N, dim, H, W), jnp.float32)   # NCHW like PyTorch
    x_h = jax.random.normal(ky, (N, dim, H, W), jnp.float32)
    class_condition = jnp.array([1, 7], dtype=jnp.int32)

    out_v, out_h = gated_masked_conv2d_pallas(
        params, x_v, x_h, class_condition,
        mask_type="A", kernel=kernel, residual=True)
    jax.block_until_ready((out_v, out_h))

    ref_v, ref_h = gated_masked_conv2d_ref(
        params, x_v, x_h, class_condition,
        mask_type="A", kernel=kernel, residual=True)

    assert out_v.shape == (N, dim, H, W) and out_h.shape == (N, dim, H, W)
    assert jnp.allclose(out_v, ref_v, atol=1e-4, rtol=1e-4), "out_v mismatch"
    assert jnp.allclose(out_h, ref_h, atol=1e-4, rtol=1e-4), "out_h mismatch"

    print("KERNEL_OK")
</pallas_src>

<mosaic_0001>
module attributes {stable_mosaic.version = 11 : i64} {
  func.func @kernel_fn(%arg0: i32, %arg1: memref<1x4x404xf32, #tpu.memory_space<vmem>>, %arg2: memref<1x4x385xf32, #tpu.memory_space<vmem>>, %arg3: memref<1x8x1xf32, #tpu.memory_space<vmem>>, %arg4: memref<1x8x1xf32, #tpu.memory_space<vmem>>, %arg5: memref<6x8x4xf32, #tpu.memory_space<vmem>>, %arg6: memref<2x8x4xf32, #tpu.memory_space<vmem>>, %arg7: memref<8x8xf32, #tpu.memory_space<vmem>>, %arg8: memref<4x4xf32, #tpu.memory_space<vmem>>, %arg9: memref<4x1xf32, #tpu.memory_space<vmem>>, %arg10: memref<1x8x384xf32, #tpu.memory_space<vmem>>) attributes {dimension_semantics = [#tpu.dimension_semantics<parallel>], iteration_bounds = array<i64: 2>, scalar_prefetch = 0 : i64, scratch_operands = 0 : i64, tpu.core_type = #tpu.core_type<tc>, window_params = [{transform_indices = @transform_0, window_bounds = array<i64: 1, 4, 404>}, {transform_indices = @transform_1, window_bounds = array<i64: 1, 4, 385>}, {transform_indices = @transform_2, window_bounds = array<i64: 1, 8, 1>}, {transform_indices = @transform_3, window_bounds = array<i64: 1, 8, 1>}, {pipeline_mode = #tpu.pipeline_mode<synchronous>, transform_indices = @transform_4, window_bounds = array<i64: 6, 8, 4>}, {pipeline_mode = #tpu.pipeline_mode<synchronous>, transform_indices = @transform_5, window_bounds = array<i64: 2, 8, 4>}, {pipeline_mode = #tpu.pipeline_mode<synchronous>, transform_indices = @transform_6, window_bounds = array<i64: 8, 8>}, {pipeline_mode = #tpu.pipeline_mode<synchronous>, transform_indices = @transform_7, window_bounds = array<i64: 4, 4>}, {pipeline_mode = #tpu.pipeline_mode<synchronous>, transform_indices = @transform_8, window_bounds = array<i64: 4, 1>}, {transform_indices = @transform_9, window_bounds = array<i64: 1, 8, 384>}]} {
    %c0 = arith.constant 0 : index
    %c0_0 = arith.constant 0 : index
    %c0_1 = arith.constant 0 : index
    %0 = vector.load %arg5[%c0, %c0_0, %c0_1] : memref<6x8x4xf32, #tpu.memory_space<vmem>>, vector<1x8x4xf32>
    %1 = vector.shape_cast %0 : vector<1x8x4xf32> to vector<8x4xf32>
    %c0_2 = arith.constant 0 : index
    %c0_3 = arith.constant 0 : index
    %c0_4 = arith.constant 0 : index
    %2 = vector.load %arg1[%c0_2, %c0_3, %c0_4] : memref<1x4x404xf32, #tpu.memory_space<vmem>>, vector<1x4x384xf32>
    %3 = vector.shape_cast %2 : vector<1x4x384xf32> to vector<4x384xf32>
    %cst = arith.constant dense<0.000000e+00> : vector<8x384xf32>
    %4 = tpu.matmul %1, %3, %cst {dimension_numbers = #tpu.dot_dimension_numbers<[1], [0], [0], [1], [0, 0, 1, 1], [], []>} : vector<8x4xf32>, vector<4x384xf32>, vector<8x384xf32> -> vector<8x384xf32>
    %c1 = arith.constant 1 : index
    %c0_5 = arith.constant 0 : index
    %c0_6 = arith.constant 0 : index
    %5 = vector.load %arg5[%c1, %c0_5, %c0_6] : memref<6x8x4xf32, #tpu.memory_space<vmem>>, vector<1x8x4xf32>
    %6 = vector.shape_cast %5 : vector<1x8x4xf32> to vector<8x4xf32>
    %c0_7 = arith.constant 0 : index
    %c0_8 = arith.constant 0 : index
    %c1_9 = arith.constant 1 : index
    %7 = vector.load %arg1[%c0_7, %c0_8, %c1_9] : memref<1x4x404xf32, #tpu.memory_space<vmem>>, vector<1x4x384xf32>
    %8 = vector.shape_cast %7 : vector<1x4x384xf32> to vector<4x384xf32>
    %cst_10 = arith.constant dense<0.000000e+00> : vector<8x384xf32>
    %9 = tpu.matmul %6, %8, %cst_10 {dimension_numbers = #tpu.dot_dimension_numbers<[1], [0], [0], [1], [0, 0, 1, 1], [], []>} : vector<8x4xf32>, vector<4x384xf32>, vector<8x384xf32> -> vector<8x384xf32>
    %10 = arith.addf %4, %9 : vector<8x384xf32>
    %c2 = arith.constant 2 : index
    %c0_11 = arith.constant 0 : index
    %c0_12 = arith.constant 0 : index
    %11 = vector.load %arg5[%c2, %c0_11, %c0_12] : memref<6x8x4xf32, #tpu.memory_space<vmem>>, vector<1x8x4xf32>
    %12 = vector.shape_cast %11 : vector<1x8x4xf32> to vector<8x4xf32>
    %c0_13 = arith.constant 0 : index
    %c0_14 = arith.constant 0 : index
    %c2_15 = arith.constant 2 : index
    %13 = vector.load %arg1[%c0_13, %c0_14, %c2_15] : memref<1x4x404xf32, #tpu.memory_space<vmem>>, vector<1x4x384xf32>
    %14 = vector.shape_cast %13 : vector<1x4x384xf32> to vector<4x384xf32>
    %cst_16 = arith.constant dense<0.000000e+00> : vector<8x384xf32>
    %15 = tpu.matmul %12, %14, %cst_16 {dimension_numbers = #tpu.dot_dimension_numbers<[1], [0], [0], [1], [0, 0, 1, 1], [], []>} : vector<8x4xf32>, vector<4x384xf32>, vector<8x384xf32> -> vector<8x384xf32>
    %16 = arith.addf %10, %15 : vector<8x384xf32>
    %c3 = arith.constant 3 : index
    %c0_17 = arith.constant 0 : index
    %c0_18 = arith.constant 0 : index
    %17 = vector.load %arg5[%c3, %c0_17, %c0_18] : memref<6x8x4xf32, #tpu.memory_space<vmem>>, vector<1x8x4xf32>
    %18 = vector.shape_cast %17 : vector<1x8x4xf32> to vector<8x4xf32>
    %c0_19 = arith.constant 0 : index
    %c0_20 = arith.constant 0 : index
    %c18 = arith.constant 18 : index
    %19 = vector.load %arg1[%c0_19, %c0_20, %c18] : memref<1x4x404xf32, #tpu.memory_space<vmem>>, vector<1x4x384xf32>
    %20 = vector.shape_cast %19 : vector<1x4x384xf32> to vector<4x384xf32>
    %cst_21 = arith.constant dense<0.000000e+00> : vector<8x384xf32>
    %21 = tpu.matmul %18, %20, %cst_21 {dimension_numbers = #tpu.dot_dimension_numbers<[1], [0], [0], [1], [0, 0, 1, 1], [], []>} : vector<8x4xf32>, vector<4x384xf32>, vector<8x384xf32> -> vector<8x384xf32>
    %22 = arith.addf %16, %21 : vector<8x384xf32>
    %c4 = arith.constant 4 : index
    %c0_22 = arith.constant 0 : index
    %c0_23 = arith.constant 0 : index
    %23 = vector.load %arg5[%c4, %c0_22, %c0_23] : memref<6x8x4xf32, #tpu.memory_space<vmem>>, vector<1x8x4xf32>
    %24 = vector.shape_cast %23 : vector<1x8x4xf32> to vector<8x4xf32>
    %c0_24 = arith.constant 0 : index
    %c0_25 = arith.constant 0 : index
    %c19 = arith.constant 19 : index
    %25 = vector.load %arg1[%c0_24, %c0_25, %c19] : memref<1x4x404xf32, #tpu.memory_space<vmem>>, vector<1x4x384xf32>
    %26 = vector.shape_cast %25 : vector<1x4x384xf32> to vector<4x384xf32>
    %cst_26 = arith.constant dense<0.000000e+00> : vector<8x384xf32>
    %27 = tpu.matmul %24, %26, %cst_26 {dimension_numbers = #tpu.dot_dimension_numbers<[1], [0], [0], [1], [0, 0, 1, 1], [], []>} : vector<8x4xf32>, vector<4x384xf32>, vector<8x384xf32> -> vector<8x384xf32>
    %28 = arith.addf %22, %27 : vector<8x384xf32>
    %c5 = arith.constant 5 : index
    %c0_27 = arith.constant 0 : index
    %c0_28 = arith.constant 0 : index
    %29 = vector.load %arg5[%c5, %c0_27, %c0_28] : memref<6x8x4xf32, #tpu.memory_space<vmem>>, vector<1x8x4xf32>
    %30 = vector.shape_cast %29 : vector<1x8x4xf32> to vector<8x4xf32>
    %c0_29 = arith.constant 0 : index
    %c0_30 = arith.constant 0 : index
    %c20 = arith.constant 20 : index
    %31 = vector.load %arg1[%c0_29, %c0_30, %c20] : memref<1x4x404xf32, #tpu.memory_space<vmem>>, vector<1x4x384xf32>
    %32 = vector.shape_cast %31 : vector<1x4x384xf32> to vector<4x384xf32>
    %cst_31 = arith.constant dense<0.000000e+00> : vector<8x384xf32>
    %33 = tpu.matmul %30, %32, %cst_31 {dimension_numbers = #tpu.dot_dimension_numbers<[1], [0], [0], [1], [0, 0, 1, 1], [], []>} : vector<8x4xf32>, vector<4x384xf32>, vector<8x384xf32> -> vector<8x384xf32>
    %34 = arith.addf %28, %33 : vector<8x384xf32>
    %c0_32 = arith.constant 0 : index
    %c0_33 = arith.constant 0 : index
    %c0_34 = arith.constant 0 : index
    %35 = vector.load %arg6[%c0_32, %c0_33, %c0_34] : memref<2x8x4xf32, #tpu.memory_space<vmem>>, vector<1x8x4xf32>
    %36 = vector.shape_cast %35 : vector<1x8x4xf32> to vector<8x4xf32>
    %c0_35 = arith.constant 0 : index
    %c0_36 = arith.constant 0 : index
    %c0_37 = arith.constant 0 : index
    %37 = vector.load %arg2[%c0_35, %c0_36, %c0_37] : memref<1x4x385xf32, #tpu.memory_space<vmem>>, vector<1x4x384xf32>
    %38 = vector.shape_cast %37 : vector<1x4x384xf32> to vector<4x384xf32>
    %cst_38 = arith.constant dense<0.000000e+00> : vector<8x384xf32>
    %39 = tpu.matmul %36, %38, %cst_38 {dimension_numbers = #tpu.dot_dimension_numbers<[1], [0], [0], [1], [0, 0, 1, 1], [], []>} : vector<8x4xf32>, vector<4x384xf32>, vector<8x384xf32> -> vector<8x384xf32>
    %c1_39 = arith.constant 1 : index
    %c0_40 = arith.constant 0 : index
    %c0_41 = arith.constant 0 : index
    %40 = vector.load %arg6[%c1_39, %c0_40, %c0_41] : memref<2x8x4xf32, #tpu.memory_space<vmem>>, vector<1x8x4xf32>
    %41 = vector.shape_cast %40 : vector<1x8x4xf32> to vector<8x4xf32>
    %c0_42 = arith.constant 0 : index
    %c0_43 = arith.constant 0 : index
    %c1_44 = arith.constant 1 : index
    %42 = vector.load %arg2[%c0_42, %c0_43, %c1_44] : memref<1x4x385xf32, #tpu.memory_space<vmem>>, vector<1x4x384xf32>
    %43 = vector.shape_cast %42 : vector<1x4x384xf32> to vector<4x384xf32>
    %cst_45 = arith.constant dense<0.000000e+00> : vector<8x384xf32>
    %44 = tpu.matmul %41, %43, %cst_45 {dimension_numbers = #tpu.dot_dimension_numbers<[1], [0], [0], [1], [0, 0, 1, 1], [], []>} : vector<8x4xf32>, vector<4x384xf32>, vector<8x384xf32> -> vector<8x384xf32>
    %45 = arith.addf %39, %44 : vector<8x384xf32>
    %c0_46 = arith.constant 0 : index
    %c0_47 = arith.constant 0 : index
    %46 = vector.load %arg7[%c0_46, %c0_47] : memref<8x8xf32, #tpu.memory_space<vmem>>, vector<8x8xf32>
    %cst_48 = arith.constant dense<0.000000e+00> : vector<8x384xf32>
    %47 = tpu.matmul %46, %34, %cst_48 {dimension_numbers = #tpu.dot_dimension_numbers<[1], [0], [0], [1], [0, 0, 1, 1], [], []>} : vector<8x8xf32>, vector<8x384xf32>, vector<8x384xf32> -> vector<8x384xf32>
    %c0_49 = arith.constant 0 : index
    %c0_50 = arith.constant 0 : index
    %c0_51 = arith.constant 0 : index
    %48 = vector.load %arg3[%c0_49, %c0_50, %c0_51] : memref<1x8x1xf32, #tpu.memory_space<vmem>>, vector<1x8x1xf32>
    %49 = vector.shape_cast %48 : vector<1x8x1xf32> to vector<8x1xf32>
    %50 = vector.broadcast %49 : vector<8x1xf32> to vector<8x384xf32>
    %51 = arith.addf %34, %50 : vector<8x384xf32>
    %52 = arith.addf %47, %45 : vector<8x384xf32>
    %c0_52 = arith.constant 0 : index
    %c0_53 = arith.constant 0 : index
    %c0_54 = arith.constant 0 : index
    %53 = vector.load %arg4[%c0_52, %c0_53, %c0_54] : memref<1x8x1xf32, #tpu.memory_space<vmem>>, vector<1x8x1xf32>
    %54 = vector.shape_cast %53 : vector<1x8x1xf32> to vector<8x1xf32>
    %55 = vector.broadcast %54 : vector<8x1xf32> to vector<8x384xf32>
    %56 = arith.addf %52, %55 : vector<8x384xf32>
    %57 = vector.extract_strided_slice %51 {offsets = [0, 0], sizes = [4, 384], strides = [1, 1]} : vector<8x384xf32> to vector<4x384xf32>
    %58 = math.tanh %57 : vector<4x384xf32>
    %59 = vector.extract_strided_slice %51 {offsets = [4, 0], sizes = [4, 384], strides = [1, 1]} : vector<8x384xf32> to vector<4x384xf32>
    %cst_55 = arith.constant 5.000000e-01 : f32
    %60 = vector.broadcast %cst_55 : f32 to vector<4x384xf32>
    %61 = arith.mulf %60, %59 : vector<4x384xf32>
    %62 = math.tanh %61 : vector<4x384xf32>
    %cst_56 = arith.constant 1.000000e+00 : f32
    %63 = vector.broadcast %cst_56 : f32 to vector<4x384xf32>
    %64 = arith.addf %63, %62 : vector<4x384xf32>
    %cst_57 = arith.constant 5.000000e-01 : f32
    %65 = vector.broadcast %cst_57 : f32 to vector<4x384xf32>
    %66 = arith.mulf %65, %64 : vector<4x384xf32>
    %67 = arith.mulf %58, %66 : vector<4x384xf32>
    %68 = vector.extract_strided_slice %56 {offsets = [0, 0], sizes = [4, 384], strides = [1, 1]} : vector<8x384xf32> to vector<4x384xf32>
    %69 = math.tanh %68 : vector<4x384xf32>
    %70 = vector.extract_strided_slice %56 {offsets = [4, 0], sizes = [4, 384], strides = [1, 1]} : vector<8x384xf32> to vector<4x384xf32>
    %cst_58 = arith.constant 5.000000e-01 : f32
    %71 = vector.broadcast %cst_58 : f32 to vector<4x384xf32>
    %72 = arith.mulf %71, %70 : vector<4x384xf32>
    %73 = math.tanh %72 : vector<4x384xf32>
    %cst_59 = arith.constant 1.000000e+00 : f32
    %74 = vector.broadcast %cst_59 : f32 to vector<4x384xf32>
    %75 = arith.addf %74, %73 : vector<4x384xf32>
    %cst_60 = arith.constant 5.000000e-01 : f32
    %76 = vector.broadcast %cst_60 : f32 to vector<4x384xf32>
    %77 = arith.mulf %76, %75 : vector<4x384xf32>
    %78 = arith.mulf %69, %77 : vector<4x384xf32>
    %c0_61 = arith.constant 0 : index
    %c0_62 = arith.constant 0 : index
    %79 = vector.load %arg8[%c0_61, %c0_62] : memref<4x4xf32, #tpu.memory_space<vmem>>, vector<4x4xf32>
    %cst_63 = arith.constant dense<0.000000e+00> : vector<4x384xf32>
    %80 = tpu.matmul %79, %78, %cst_63 {dimension_numbers = #tpu.dot_dimension_numbers<[1], [0], [0], [1], [0, 0, 1, 1], [], []>} : vector<4x4xf32>, vector<4x384xf32>, vector<4x384xf32> -> vector<4x384xf32>
    %c0_64 = arith.constant 0 : index
    %c0_65 = arith.constant 0 : index
    %81 = vector.load %arg9[%c0_64, %c0_65] : memref<4x1xf32, #tpu.memory_space<vmem>>, vector<4x1xf32>
    %82 = vector.broadcast %81 : vector<4x1xf32> to vector<4x384xf32>
    %83 = arith.addf %80, %82 : vector<4x384xf32>
    %c0_66 = arith.constant 0 : index
    %c0_67 = arith.constant 0 : index
    %c1_68 = arith.constant 1 : index
    %84 = vector.load %arg2[%c0_66, %c0_67, %c1_68] : memref<1x4x385xf32, #tpu.memory_space<vmem>>, vector<1x4x384xf32>
    %85 = vector.shape_cast %84 : vector<1x4x384xf32> to vector<4x384xf32>
    %86 = arith.addf %83, %85 : vector<4x384xf32>
    %c0_69 = arith.constant 0 : index
    %c0_70 = arith.constant 0 : index
    %c0_71 = arith.constant 0 : index
    %87 = vector.load %arg10[%c0_69, %c0_70, %c0_71] : memref<1x8x384xf32, #tpu.memory_space<vmem>>, vector<1x4x384xf32>
    %88 = vector.shape_cast %87 : vector<1x4x384xf32> to vector<4x384xf32>
    %89 = vector.shape_cast %67 : vector<4x384xf32> to vector<1x4x384xf32>
    tpu.vector_store %arg10[%c0_69, %c0_70, %c0_71], %89 {strides = array<i32>} : memref<1x8x384xf32, #tpu.memory_space<vmem>>, vector<1x4x384xf32>,
    %c0_72 = arith.constant 0 : index
    %c4_73 = arith.constant 4 : index
    %c0_74 = arith.constant 0 : index
    %90 = vector.load %arg10[%c0_72, %c4_73, %c0_74] : memref<1x8x384xf32, #tpu.memory_space<vmem>>, vector<1x4x384xf32>
    %91 = vector.shape_cast %90 : vector<1x4x384xf32> to vector<4x384xf32>
    %92 = vector.shape_cast %86 : vector<4x384xf32> to vector<1x4x384xf32>
    tpu.vector_store %arg10[%c0_72, %c4_73, %c0_74], %92 {strides = array<i32>} : memref<1x8x384xf32, #tpu.memory_space<vmem>>, vector<1x4x384xf32>,
    return
  }
  func.func @transform_0(%arg0: i32) -> (i32, i32, i32) {
    %c0_i32 = arith.constant 0 : i32
    %c0_i32_0 = arith.constant 0 : i32
    %c0_i32_1 = arith.constant 0 : i32
    return %arg0, %c0_i32, %c0_i32_0 : i32, i32, i32
  }
  func.func @transform_1(%arg0: i32) -> (i32, i32, i32) {
    %c0_i32 = arith.constant 0 : i32
    %c0_i32_0 = arith.constant 0 : i32
    %c0_i32_1 = arith.constant 0 : i32
    return %arg0, %c0_i32, %c0_i32_0 : i32, i32, i32
  }
  func.func @transform_2(%arg0: i32) -> (i32, i32, i32) {
    %c0_i32 = arith.constant 0 : i32
    %c0_i32_0 = arith.constant 0 : i32
    %c0_i32_1 = arith.constant 0 : i32
    return %arg0, %c0_i32, %c0_i32_0 : i32, i32, i32
  }
  func.func @transform_3(%arg0: i32) -> (i32, i32, i32) {
    %c0_i32 = arith.constant 0 : i32
    %c0_i32_0 = arith.constant 0 : i32
    %c0_i32_1 = arith.constant 0 : i32
    return %arg0, %c0_i32, %c0_i32_0 : i32, i32, i32
  }
  func.func @transform_4(%arg0: i32) -> (i32, i32, i32) {
    %c0_i32 = arith.constant 0 : i32
    %c0_i32_0 = arith.constant 0 : i32
    %c0_i32_1 = arith.constant 0 : i32
    %c0_i32_2 = arith.constant 0 : i32
    return %c0_i32, %c0_i32_0, %c0_i32_1 : i32, i32, i32
  }
  func.func @transform_5(%arg0: i32) -> (i32, i32, i32) {
    %c0_i32 = arith.constant 0 : i32
    %c0_i32_0 = arith.constant 0 : i32
    %c0_i32_1 = arith.constant 0 : i32
    %c0_i32_2 = arith.constant 0 : i32
    return %c0_i32, %c0_i32_0, %c0_i32_1 : i32, i32, i32
  }
  func.func @transform_6(%arg0: i32) -> (i32, i32) {
    %c0_i32 = arith.constant 0 : i32
    %c0_i32_0 = arith.constant 0 : i32
    %c0_i32_1 = arith.constant 0 : i32
    return %c0_i32, %c0_i32_0 : i32, i32
  }
  func.func @transform_7(%arg0: i32) -> (i32, i32) {
    %c0_i32 = arith.constant 0 : i32
    %c0_i32_0 = arith.constant 0 : i32
    %c0_i32_1 = arith.constant 0 : i32
    return %c0_i32, %c0_i32_0 : i32, i32
  }
  func.func @transform_8(%arg0: i32) -> (i32, i32) {
    %c0_i32 = arith.constant 0 : i32
    %c0_i32_0 = arith.constant 0 : i32
    %c0_i32_1 = arith.constant 0 : i32
    return %c0_i32, %c0_i32_0 : i32, i32
  }
  func.func @transform_9(%arg0: i32) -> (i32, i32, i32) {
    %c0_i32 = arith.constant 0 : i32
    %c0_i32_0 = arith.constant 0 : i32
    %c0_i32_1 = arith.constant 0 : i32
    return %arg0, %c0_i32, %c0_i32_0 : i32, i32, i32
  }
}

</mosaic_0001>

<llo_original>
// kernel: tpu_custom_call.1
$region0: #{tpu_custom_call.1}
  #allocation0 [shape = 'u32[]', space=smem, size = 0x4, offset = 0x4, fixed_abs, tag = 'smem constant byte address 0x4 - core index']
  #allocation1 [shape = 'u32[144,128]{1,0:T(1,128)}', space=vmem, size = 0x12000, scoped, tag = 'internal scratch']
  %s0 = inlined_call_operand.vmem [shape: f32[2,4,404], index: 0, kind: input, shape index: {}]
  %s1 = inlined_call_operand.vmem [shape: f32[2,4,385], index: 1, kind: input, shape index: {}]
  %s2 = inlined_call_operand.vmem [shape: f32[2,8,1], index: 2, kind: input, shape index: {}]
  %s3 = inlined_call_operand.vmem [shape: f32[2,8,1], index: 3, kind: input, shape index: {}]
  %s4 = inlined_call_operand.vmem [shape: f32[6,8,4], index: 4, kind: input, shape index: {}]
  %s5 = inlined_call_operand.vmem [shape: f32[2,8,4], index: 5, kind: input, shape index: {}]
  %s6 = inlined_call_operand.vmem [shape: f32[8,8], index: 6, kind: input, shape index: {}]
  %s7 = inlined_call_operand.vmem [shape: f32[4,4], index: 7, kind: input, shape index: {}]
  %s8 = inlined_call_operand.vmem [shape: f32[4,1], index: 8, kind: input, shape index: {}]
  %s9 = inlined_call_operand.hbm [shape: f32[2,8,384], index: 9, kind: output, shape index: {}]
  %s10 = sld [smem:[#allocation0]]
  $region69: #{tpu_custom_call.1} parent=0
    _
  %s12 = ssub.s32 1, %s10
  %s13 = scalar_select 0, %s12, %s10
  $region1: #{tpu_custom_call.1} parent=0
    #allocation2 [shape = 'u8[24576]{0}', space=vmem, size = 0x6000, scoped, tag = 'output window, operand 0']
    #allocation3 [shape = 's32[2]{0}', space=sflag, size = 0x8, scoped, tag = 'scoped memory for tpu_custom_call.1']
    %14 = vsyncpa [#allocation3], 0
    %s15 = scalar_lea.sflag [#allocation3], 1
    %16 = vsyncpa %s15, 0
    loop: start=0, step=1, limit=4
    $region2: #{tpu_custom_call.1} parent=1 // loop_pre_header
      _
    $region3: #{tpu_custom_call.1} parent=1 // loop_header
      %s18 = sphi 0, %s22
      %p19 = scmp.ge.s32.totalorder %s18, 4
      %s28 = sphi 0, %s30
      %s31 = sphi 0, %s28
      %s32 = sphi 0, %s31
      %s48 = sphi 0, %s32
      %s54 = sphi 0, %s56
      %s57 = sphi 0, %s54
      %s58 = sphi 0, %s57
      %s74 = sphi 0, %s58
      %s80 = sphi 0, %s82
      %s83 = sphi 0, %s80
      %s84 = sphi 0, %s83
      %s100 = sphi 0, %s84
      %s106 = sphi 0, %s108
      %s109 = sphi 0, %s106
      %s110 = sphi 0, %s109
      %s126 = sphi 0, %s110
      %s130 = sphi 0, %s130
      %s132 = sphi 0, %s130
      %s133 = sphi 0, %s132
      %s147 = sphi 0, %s133
      %s151 = sphi 0, %s151
      %s153 = sphi 0, %s151
      %s154 = sphi 0, %s153
      %s168 = sphi 0, %s154
      %s172 = sphi 0, %s172
      %s174 = sphi 0, %s172
      %s175 = sphi 0, %s174
      %s189 = sphi 0, %s175
      %s193 = sphi 0, %s193
      %s195 = sphi 0, %s193
      %s196 = sphi 0, %s195
      %s210 = sphi 0, %s196
      %s214 = sphi 0, %s214
      %s216 = sphi 0, %s214
      %s217 = sphi 0, %s216
      %s231 = sphi 0, %s217
      %s237 = sphi 0, %s239
      %s240 = sphi 0, %s237
      %s241 = sphi 0, %s240
      %s257 = sphi 0, %s241
    $region4: #{tpu_custom_call.1} parent=1 // loop_header_branch
      %21 = sbr.rel (%p19) target = $region8
    $region5: #{tpu_custom_call.1} parent=1 // loop_body
      %s23 = ssub.s32 %s18, 1
      %s24 = ssub.s32 %s18, 2
      %s25 = sadd.s32 %s18, 1
      %s26 = ssub.s32 %s18, %s25
      %p27 = scmp.eq.s32.totalorder %s26, 0
      %s29 = sadd.s32 %s28, 1
      %s30 = scalar_select %p27, %s28, %s29
      %p33 = pneg %p27
      %p34 = scmp.eq.s32.totalorder %s18, 1
      %p35 = por %p33, %p34
      %p36 = scmp.ne.s32.totalorder %s28, %s31
      %p37 = scmp.eq.s32.totalorder %s18, 0
      %p38 = por %p36, %p37
      %p39 = scmp.ne.s32.totalorder %s28, %s31
      %p40 = scmp.eq.s32.totalorder %s23, 1
      %p41 = por %p39, %p40
      %p42 = scmp.ne.s32.totalorder %s31, %s32
      %p43 = scmp.eq.s32.totalorder %s23, 0
      %p44 = por %p42, %p43
      %p45 = scmp.ne.s32.totalorder %s31, %s32
      %p46 = scmp.eq.s32.totalorder %s24, 1
      %p47 = por %p45, %p46
      %p49 = scmp.ne.s32.totalorder %s32, %s48
      %p50 = scmp.eq.s32.totalorder %s24, 0
      %p51 = por %p49, %p50
      %s52 = ssub.s32 %s18, %s25
      %p53 = scmp.eq.s32.totalorder %s52, 0
      %s55 = sadd.s32 %s54, 1
      %s56 = scalar_select %p53, %s54, %s55
      %p59 = pneg %p53
      %p60 = scmp.eq.s32.totalorder %s18, 1
      %p61 = por %p59, %p60
      %p62 = scmp.ne.s32.totalorder %s54, %s57
      %p63 = scmp.eq.s32.totalorder %s18, 0
      %p64 = por %p62, %p63
      %p65 = scmp.ne.s32.totalorder %s54, %s57
      %p66 = scmp.eq.s32.totalorder %s23, 1
      %p67 = por %p65, %p66
      %p68 = scmp.ne.s32.totalorder %s57, %s58
      %p69 = scmp.eq.s32.totalorder %s23, 0
      %p70 = por %p68, %p69
      %p71 = scmp.ne.s32.totalorder %s57, %s58
      %p72 = scmp.eq.s32.totalorder %s24, 1
      %p73 = por %p71, %p72
      %p75 = scmp.ne.s32.totalorder %s58, %s74
      %p76 = scmp.eq.s32.totalorder %s24, 0
      %p77 = por %p75, %p76
      %s78 = ssub.s32 %s18, %s25
      %p79 = scmp.eq.s32.totalorder %s78, 0
      %s81 = sadd.s32 %s80, 1
      %s82 = scalar_select %p79, %s80, %s81
      %p85 = pneg %p79
      %p86 = scmp.eq.s32.totalorder %s18, 1
      %p87 = por %p85, %p86
      %p88 = scmp.ne.s32.totalorder %s80, %s83
      %p89 = scmp.eq.s32.totalorder %s18, 0
      %p90 = por %p88, %p89
      %p91 = scmp.ne.s32.totalorder %s80, %s83
      %p92 = scmp.eq.s32.totalorder %s23, 1
      %p93 = por %p91, %p92
      %p94 = scmp.ne.s32.totalorder %s83, %s84
      %p95 = scmp.eq.s32.totalorder %s23, 0
      %p96 = por %p94, %p95
      %p97 = scmp.ne.s32.totalorder %s83, %s84
      %p98 = scmp.eq.s32.totalorder %s24, 1
      %p99 = por %p97, %p98
      %p101 = scmp.ne.s32.totalorder %s84, %s100
      %p102 = scmp.eq.s32.totalorder %s24, 0
      %p103 = por %p101, %p102
      %s104 = ssub.s32 %s18, %s25
      %p105 = scmp.eq.s32.totalorder %s104, 0
      %s107 = sadd.s32 %s106, 1
      %s108 = scalar_select %p105, %s106, %s107
      %p111 = pneg %p105
      %p112 = scmp.eq.s32.totalorder %s18, 1
      %p113 = por %p111, %p112
      %p114 = scmp.ne.s32.totalorder %s106, %s109
      %p115 = scmp.eq.s32.totalorder %s18, 0
      %p116 = por %p114, %p115
      %p117 = scmp.ne.s32.totalorder %s106, %s109
      %p118 = scmp.eq.s32.totalorder %s23, 1
      %p119 = por %p117, %p118
      %p120 = scmp.ne.s32.totalorder %s109, %s110
      %p121 = scmp.eq.s32.totalorder %s23, 0
      %p122 = por %p120, %p121
      %p123 = scmp.ne.s32.totalorder %s109, %s110
      %p124 = scmp.eq.s32.totalorder %s24, 1
      %p125 = por %p123, %p124
      %p127 = scmp.ne.s32.totalorder %s110, %s126
      %p128 = scmp.eq.s32.totalorder %s24, 0
      %p129 = por %p127, %p128
      %s131 = sadd.s32 %s130, 1
      %p134 = scmp.eq.s32.totalorder %s18, 1
      %p135 = scmp.ne.s32.totalorder %s130, %s132
      %p136 = scmp.eq.s32.totalorder %s18, 0
      %p137 = por %p135, %p136
      %p138 = scmp.ne.s32.totalorder %s130, %s132
      %p139 = scmp.eq.s32.totalorder %s23, 1
      %p140 = por %p138, %p139
      %p141 = scmp.ne.s32.totalorder %s132, %s133
      %p142 = scmp.eq.s32.totalorder %s23, 0
      %p143 = por %p141, %p142
      %p144 = scmp.ne.s32.totalorder %s132, %s133
      %p145 = scmp.eq.s32.totalorder %s24, 1
      %p146 = por %p144, %p145
      %p148 = scmp.ne.s32.totalorder %s133, %s147
      %p149 = scmp.eq.s32.totalorder %s24, 0
      %p150 = por %p148, %p149
      %s152 = sadd.s32 %s151, 1
      %p155 = scmp.eq.s32.totalorder %s18, 1
      %p156 = scmp.ne.s32.totalorder %s151, %s153
      %p157 = scmp.eq.s32.totalorder %s18, 0
      %p158 = por %p156, %p157
      %p159 = scmp.ne.s32.totalorder %s151, %s153
      %p160 = scmp.eq.s32.totalorder %s23, 1
      %p161 = por %p159, %p160
      %p162 = scmp.ne.s32.totalorder %s153, %s154
      %p163 = scmp.eq.s32.totalorder %s23, 0
      %p164 = por %p162, %p163
      %p165 = scmp.ne.s32.totalorder %s153, %s154
      %p166 = scmp.eq.s32.totalorder %s24, 1
      %p167 = por %p165, %p166
      %p169 = scmp.ne.s32.totalorder %s154, %s168
      %p170 = scmp.eq.s32.totalorder %s24, 0
      %p171 = por %p169, %p170
      %s173 = sadd.s32 %s172, 1
      %p176 = scmp.eq.s32.totalorder %s18, 1
      %p177 = scmp.ne.s32.totalorder %s172, %s174
      %p178 = scmp.eq.s32.totalorder %s18, 0
      %p179 = por %p177, %p178
      %p180 = scmp.ne.s32.totalorder %s172, %s174
      %p181 = scmp.eq.s32.totalorder %s23, 1
      %p182 = por %p180, %p181
      %p183 = scmp.ne.s32.totalorder %s174, %s175
      %p184 = scmp.eq.s32.totalorder %s23, 0
      %p185 = por %p183, %p184
      %p186 = scmp.ne.s32.totalorder %s174, %s175
      %p187 = scmp.eq.s32.totalorder %s24, 1
      %p188 = por %p186, %p187
      %p190 = scmp.ne.s32.totalorder %s175, %s189
      %p191 = scmp.eq.s32.totalorder %s24, 0
      %p192 = por %p190, %p191
      %s194 = sadd.s32 %s193, 1
      %p197 = scmp.eq.s32.totalorder %s18, 1
      %p198 = scmp.ne.s32.totalorder %s193, %s195
      %p199 = scmp.eq.s32.totalorder %s18, 0
      %p200 = por %p198, %p199
      %p201 = scmp.ne.s32.totalorder %s193, %s195
      %p202 = scmp.eq.s32.totalorder %s23, 1
      %p203 = por %p201, %p202
      %p204 = scmp.ne.s32.totalorder %s195, %s196
      %p205 = scmp.eq.s32.totalorder %s23, 0
      %p206 = por %p204, %p205
      %p207 = scmp.ne.s32.totalorder %s195, %s196
      %p208 = scmp.eq.s32.totalorder %s24, 1
      %p209 = por %p207, %p208
      %p211 = scmp.ne.s32.totalorder %s196, %s210
      %p212 = scmp.eq.s32.totalorder %s24, 0
      %p213 = por %p211, %p212
      %s215 = sadd.s32 %s214, 1
      %p218 = scmp.eq.s32.totalorder %s18, 1
      %p219 = scmp.ne.s32.totalorder %s214, %s216
      %p220 = scmp.eq.s32.totalorder %s18, 0
      %p221 = por %p219, %p220
      %p222 = scmp.ne.s32.totalorder %s214, %s216
      %p223 = scmp.eq.s32.totalorder %s23, 1
      %p224 = por %p222, %p223
      %p225 = scmp.ne.s32.totalorder %s216, %s217
      %p226 = scmp.eq.s32.totalorder %s23, 0
      %p227 = por %p225, %p226
      %p228 = scmp.ne.s32.totalorder %s216, %s217
      %p229 = scmp.eq.s32.totalorder %s24, 1
      %p230 = por %p228, %p229
      %p232 = scmp.ne.s32.totalorder %s217, %s231
      %p233 = scmp.eq.s32.totalorder %s24, 0
      %p234 = por %p232, %p233
      %s235 = ssub.s32 %s18, %s25
      %p236 = scmp.eq.s32.totalorder %s235, 0
      %s238 = sadd.s32 %s237, 1
      %s239 = scalar_select %p236, %s237, %s238
      %p242 = pneg %p236
      %p243 = scmp.eq.s32.totalorder %s18, 1
      %p244 = por %p242, %p243
      %p245 = scmp.ne.s32.totalorder %s237, %s240
      %p246 = scmp.eq.s32.totalorder %s18, 0
      %p247 = por %p245, %p246
      %p248 = scmp.ne.s32.totalorder %s237, %s240
      %p249 = scmp.eq.s32.totalorder %s23, 1
      %p250 = por %p248, %p249
      %p251 = scmp.ne.s32.totalorder %s240, %s241
      %p252 = scmp.eq.s32.totalorder %s23, 0
      %p253 = por %p251, %p252
      %p254 = scmp.ne.s32.totalorder %s240, %s241
      %p255 = scmp.eq.s32.totalorder %s24, 1
      %p256 = por %p254, %p255
      %p258 = scmp.ne.s32.totalorder %s241, %s257
      %p259 = scmp.eq.s32.totalorder %s24, 0
      %p260 = por %p258, %p259
      %p261 = scmp.le.s32.totalorder 1, %s18
      %p262 = scmp.lt.s32.totalorder %s18, 3
      %p263 = pnand %p261, %p262
      %p264 = pneg %p263
      // Predicated region
      $region9: #{tpu_custom_call.1} parent=5 // pred_check
        _
      $region10: #{tpu_custom_call.1} parent=5 // pred_check_branch
        %266 = sbr.rel (%p263) target = $region12
      $region11: #{tpu_custom_call.1} parent=5 // pred_region
        %s267 = ssub.s32 %s18, 1
        // Predicated region
        $region13: #{tpu_custom_call.1} parent=11 // pred_check
          %p268 = pneg %p143
        $region14: #{tpu_custom_call.1} parent=11 // pred_check_branch
          %270 = sbr.rel (%p268) target = $region16
        $region15: #{tpu_custom_call.1} parent=11 // pred_region
          _
        $region16: #{tpu_custom_call.1} parent=11 // pred_fallthru
          _
        // Predicated region
        $region17: #{tpu_custom_call.1} parent=11 // pred_check
          %p271 = pneg %p164
        $region18: #{tpu_custom_call.1} parent=11 // pred_check_branch
          %273 = sbr.rel (%p271) target = $region20
        $region19: #{tpu_custom_call.1} parent=11 // pred_region
          _
        $region20: #{tpu_custom_call.1} parent=11 // pred_fallthru
          _
        // Predicated region
        $region21: #{tpu_custom_call.1} parent=11 // pred_check
          %p274 = pneg %p185
        $region22: #{tpu_custom_call.1} parent=11 // pred_check_branch
          %276 = sbr.rel (%p274) target = $region24
        $region23: #{tpu_custom_call.1} parent=11 // pred_region
          _
        $region24: #{tpu_custom_call.1} parent=11 // pred_fallthru
          _
        // Predicated region
        $region25: #{tpu_custom_call.1} parent=11 // pred_check
          %p277 = pneg %p206
        $region26: #{tpu_custom_call.1} parent=11 // pred_check_branch
          %279 = sbr.rel (%p277) target = $region28
        $region27: #{tpu_custom_call.1} parent=11 // pred_region
          _
        $region28: #{tpu_custom_call.1} parent=11 // pred_fallthru
          _
        // Predicated region
        $region29: #{tpu_custom_call.1} parent=11 // pred_check
          %p280 = pneg %p227
        $region30: #{tpu_custom_call.1} parent=11 // pred_check_branch
          %282 = sbr.rel (%p280) target = $region32
        $region31: #{tpu_custom_call.1} parent=11 // pred_region
          _
        $region32: #{tpu_custom_call.1} parent=11 // pred_fallthru
          _
      $region12: #{tpu_custom_call.1} parent=5 // pred_fallthru
        _
      %p283 = scmp.lt.s32.totalorder %s18, 2
      // Predicated region
      $region33: #{tpu_custom_call.1} parent=5 // pred_check
        %p284 = pneg %p283
      $region34: #{tpu_custom_call.1} parent=5 // pred_check_branch
        %286 = sbr.rel (%p284) target = $region36
      $region35: #{tpu_custom_call.1} parent=5 // pred_region
        // Predicated region
        $region37: #{tpu_custom_call.1} parent=35 // pred_check
          %p287 = pneg %p38
        $region38: #{tpu_custom_call.1} parent=35 // pred_check_branch
          %289 = sbr.rel (%p287) target = $region40
        $region39: #{tpu_custom_call.1} parent=35 // pred_region
          %p290 = scmp.lt.s32.totalorder %s18, 1
          %s291 = scalar_select %p290, %s18, 1
          %s292 = smul.addr %s291, 4
          %s293 = smul.addr %s292, 4
          %s294 = scalar_lea.vmem %s0, %s293
        $region40: #{tpu_custom_call.1} parent=35 // pred_fallthru
          _
        // Predicated region
        $region41: #{tpu_custom_call.1} parent=35 // pred_check
          %p295 = pneg %p64
        $region42: #{tpu_custom_call.1} parent=35 // pred_check_branch
          %297 = sbr.rel (%p295) target = $region44
        $region43: #{tpu_custom_call.1} parent=35 // pred_region
          %p298 = scmp.lt.s32.totalorder %s18, 1
          %s299 = scalar_select %p298, %s18, 1
          %s300 = smul.addr %s299, 4
          %s301 = smul.addr %s300, 4
          %s302 = scalar_lea.vmem %s1, %s301
        $region44: #{tpu_custom_call.1} parent=35 // pred_fallthru
          _
        // Predicated region
        $region45: #{tpu_custom_call.1} parent=35 // pred_check
          %p303 = pneg %p90
        $region46: #{tpu_custom_call.1} parent=35 // pred_check_branch
          %305 = sbr.rel (%p303) target = $region48
        $region47: #{tpu_custom_call.1} parent=35 // pred_region
          %p306 = scmp.lt.s32.totalorder %s18, 1
          %s307 = scalar_select %p306, %s18, 1
          %s308 = smul.addr %s307, 8
          %s309 = scalar_lea.vmem %s2, %s308
        $region48: #{tpu_custom_call.1} parent=35 // pred_fallthru
          _
        // Predicated region
        $region49: #{tpu_custom_call.1} parent=35 // pred_check
          %p310 = pneg %p116
        $region50: #{tpu_custom_call.1} parent=35 // pred_check_branch
          %312 = sbr.rel (%p310) target = $region52
        $region51: #{tpu_custom_call.1} parent=35 // pred_region
          %p313 = scmp.lt.s32.totalorder %s18, 1
          %s314 = scalar_select %p313, %s18, 1
          %s315 = smul.addr %s314, 8
          %s316 = scalar_lea.vmem %s3, %s315
        $region52: #{tpu_custom_call.1} parent=35 // pred_fallthru
          _
      $region36: #{tpu_custom_call.1} parent=5 // pred_fallthru
        _
      %p317 = scmp.le.s32.totalorder 1, %s18
      %p318 = scmp.lt.s32.totalorder %s18, 3
      %p319 = pnand %p317, %p318
      %p320 = pneg %p319
      // Predicated region
      $region53: #{tpu_custom_call.1} parent=5 // pred_check
        _
      $region54: #{tpu_custom_call.1} parent=5 // pred_check_branch
        %322 = sbr.rel (%p319) target = $region56
      $region55: #{tpu_custom_call.1} parent=5 // pred_region
        %s323 = ssub.s32 %s18, 1
        %p324 = scmp.lt.s32.totalorder %s23, 1
        %s325 = scalar_select %p324, %s23, 1
        %s326 = smul.addr %s325, 4
        %s327 = smul.addr %s326, 4
        %s328 = scalar_lea.vmem %s0, %s327
        %p329 = pneg %p44
        %p330 = pneg %p41
        %p331 = scmp.lt.s32.totalorder %s23, 1
        %s332 = scalar_select %p331, %s23, 1
        %s333 = smul.addr %s332, 4
        %s334 = smul.addr %s333, 4
        %s335 = scalar_lea.vmem %s1, %s334
        %p336 = pneg %p70
        %p337 = pneg %p67
        %p338 = scmp.lt.s32.totalorder %s23, 1
        %s339 = scalar_select %p338, %s23, 1
        %s340 = smul.addr %s339, 8
        %s341 = scalar_lea.vmem %s2, %s340
        %p342 = pneg %p96
        %p343 = pneg %p93
        %p344 = scmp.lt.s32.totalorder %s23, 1
        %s345 = scalar_select %p344, %s23, 1
        %s346 = smul.addr %s345, 8
        %s347 = scalar_lea.vmem %s3, %s346
        %p348 = pneg %p122
        %p349 = pneg %p119
        %p350 = pneg %p143
        %p351 = pneg %p140
        %p352 = pneg %p164
        %p353 = pneg %p161
        %p354 = pneg %p185
        %p355 = pneg %p182
        %p356 = pneg %p206
        %p357 = pneg %p203
        %p358 = pneg %p227
        %p359 = pneg %p224
        %p360 = pneg %p253
        %p361 = pneg %p250
        %s362 = sand.u32 %s240, 1
        %s363 = scalar_lea.sflag [#allocation3], %s362
        %s364 = sand.u32 %s240, 1
        %s365 = smul.addr %s364, 24
        %s366 = scalar_lea.vmem [#allocation2], %s365
        %p367 = scmp.lt.s32.totalorder %s23, 1
        %s368 = scalar_select %p367, %s23, 1
        %s369 = smul.addr %s368, 4
        %s370 = smul.addr %s369, 4
        %s371 = scalar_lea.vmem %s0, %s370
        %p372 = scmp.lt.s32.totalorder %s23, 1
        %s373 = scalar_select %p372, %s23, 1
        %s374 = smul.addr %s373, 4
        %s375 = smul.addr %s374, 4
        %s376 = scalar_lea.vmem %s1, %s375
        %p377 = scmp.lt.s32.totalorder %s23, 1
        %s378 = scalar_select %p377, %s23, 1
        %s379 = smul.addr %s378, 8
        %s380 = scalar_lea.vmem %s2, %s379
        %p381 = scmp.lt.s32.totalorder %s23, 1
        %s382 = scalar_select %p381, %s23, 1
        %s383 = smul.addr %s382, 8
        %s384 = scalar_lea.vmem %s3, %s383
        %v385 = vld [vmem:[%s4] sm:$0xff]
        %v386 = vld [vmem:[%s371] sm:$0xff]
        %v387 = vld [vmem:[%s371 + $0x8] sm:$0xf]
        %s388 = scalar_lea.vmem %s4, 8
        %v389 = vld [vmem:[%s388] sm:$0xff]
        %v390 = vld [vmem:[%s371 + $0x8] sm:$0xff]
        %v393 = vcombine.high %v386, %v386
        %v394 = vcombine.high %v390, %v390
        %395 = vrot.lane.b32.xlu0 %v386, 127
        %v396 = vpop.permute.xlu0 %395
        %397 = vrot.lane.b32.xlu0 %v393, 127
        %v398 = vpop.permute.xlu0 %397
        %399 = vrot.lane.b32.xlu0 %v390, 127
        %v400 = vpop.permute.xlu0 %399
        %401 = vrot.lane.b32.xlu0 %v394, 127
        %v402 = vpop.permute.xlu0 %401
        %vm403 = vcmask 1039360
        %v404 = vsel %vm403, %v396, %v398
        %v405 = vsel %vm403, %v398, %v400
        %v406 = vsel %vm403, %v400, %v402
        %vm407 = vcmask 31744
        %v409 = vsel %vm407, %v389, 0
        %vm411 = vcmask 1043456
        %v412 = vsel %vm411, %v404, 0
        %v414 = vsel %vm411, %v405, 0
        %v416 = vsel %vm411, %v406, 0
        %418 = vmatprep.subr.mxu0 %v414
        %419 = vmatpush1.msra.mxu0 %v412
        %420 = vmatprep.subr.mxu0 0.0
        %421 = vmatpush1.msra.mxu0 0.0
        %422 = vmatprep.subr.mxu0 0.0
        %423 = vmatpush1.msra.mxu0 0.0
        %424 = vmatprep.subr.mxu0 0.0
        %425 = vmatpush1.msra.mxu0 0.0
        %426 = vmatprep.subr.mxu0 0.0
        %427 = vmatpush1.msra.mxu0 0.0
        %428 = vmatprep.subr.mxu0 0.0
        %429 = vmatpush1.msra.mxu0 0.0
        %430 = vmatprep.subr.mxu0 0.0
        %431 = vmatpush1.msra.mxu0 0.0
        %432 = vmatprep.subr.mxu0 0.0
        %433 = vmatpush1.msra.mxu0 0.0
        %434 = vmatprep.subr.mxu0 0.0
        %435 = vmatpush1.msra.mxu0 0.0
        %436 = vmatprep.subr.mxu0 0.0
        %437 = vmatpush1.msra.mxu0 0.0
        %438 = vmatprep.subr.mxu0 0.0
        %439 = vmatpush1.msra.mxu0 0.0
        %440 = vmatprep.subr.mxu0 0.0
        %441 = vmatpush1.msra.mxu0 0.0
        %442 = vmatprep.subr.mxu0 0.0
        %443 = vmatpush1.msra.mxu0 0.0
        %444 = vmatprep.subr.mxu0 0.0
        %445 = vmatpush1.msra.mxu0 0.0
        %446 = vmatprep.subr.mxu0 0.0
        %447 = vmatpush1.msra.mxu0 0.0
        %448 = vmatprep.subr.mxu0 0.0
        %449 = vmatpush1.msra.mxu0 0.0
        %450 = vmatprep.subr.mxu0 0.0
        %451 = vmatpush1.msra.mxu0 0.0
        %452 = vmatprep.subr.mxu0 0.0
        %453 = vmatpush1.msra.mxu0 0.0
        %454 = vmatprep.subr.mxu0 0.0
        %455 = vmatpush1.msra.mxu0 0.0
        %456 = vmatprep.subr.mxu0 0.0
        %457 = vmatpush1.msra.mxu0 0.0
        %458 = vmatprep.subr.mxu0 0.0
        %459 = vmatpush1.msra.mxu0 0.0
        %460 = vmatprep.subr.mxu0 0.0
        %461 = vmatpush1.msra.mxu0 0.0
        %462 = vmatprep.subr.mxu0 0.0
        %463 = vmatpush1.msra.mxu0 0.0
        %464 = vmatprep.subr.mxu0 0.0
        %465 = vmatpush1.msra.mxu0 0.0
        %466 = vmatprep.subr.mxu0 0.0
        %467 = vmatpush1.msra.mxu0 0.0
        %468 = vmatprep.subr.mxu0 0.0
        %469 = vmatpush1.msra.mxu0 0.0
        %470 = vmatprep.subr.mxu0 0.0
        %471 = vmatpush1.msra.mxu0 0.0
        %472 = vmatprep.subr.mxu0 0.0
        %473 = vmatpush1.msra.mxu0 0.0
        %474 = vmatprep.subr.mxu0 0.0
        %475 = vmatpush1.msra.mxu0 0.0
        %476 = vmatprep.subr.mxu0 0.0
        %477 = vmatpush1.msra.mxu0 0.0
        %478 = vmatprep.subr.mxu0 0.0
        %479 = vmatpush1.msra.mxu0 0.0
        %480 = vmatprep.subr.mxu0 0.0
        %481 = vmatpush1.msra.mxu0 0.0
        %482 = vmatprep.mubr.f32.mxu0 0.0
        %483 = vmatmul.mubr.f32.gmra.mrb[0].mxu0 %v409
        %v484 = vpop.f32.mrb[0].mxu0
        %v485 = vadd.f32 0.0, %v484
        %v486 = vpop.f32.mrb[0].mxu0
        %v487 = vadd.f32 0.0, %v486
        %488 = vdwg.mxu0
        %489 = vmatprep.subr.mxu0 0.0
        %490 = vmatpush1.msra.mxu0 %v416
        %491 = vmatprep.subr.mxu0 0.0
        %492 = vmatpush1.msra.mxu0 0.0
        %493 = vmatprep.subr.mxu0 0.0
        %494 = vmatpush1.msra.mxu0 0.0
        %495 = vmatprep.subr.mxu0 0.0
        %496 = vmatpush1.msra.mxu0 0.0
        %497 = vmatprep.subr.mxu0 0.0
        %498 = vmatpush1.msra.mxu0 0.0
        %499 = vmatprep.subr.mxu0 0.0
        %500 = vmatpush1.msra.mxu0 0.0
        %501 = vmatprep.subr.mxu0 0.0
        %502 = vmatpush1.msra.mxu0 0.0
        %503 = vmatprep.subr.mxu0 0.0
        %504 = vmatpush1.msra.mxu0 0.0
        %505 = vmatprep.subr.mxu0 0.0
        %506 = vmatpush1.msra.mxu0 0.0
        %507 = vmatprep.subr.mxu0 0.0
        %508 = vmatpush1.msra.mxu0 0.0
        %509 = vmatprep.subr.mxu0 0.0
        %510 = vmatpush1.msra.mxu0 0.0
        %511 = vmatprep.subr.mxu0 0.0
        %512 = vmatpush1.msra.mxu0 0.0
        %513 = vmatprep.subr.mxu0 0.0
        %514 = vmatpush1.msra.mxu0 0.0
        %515 = vmatprep.subr.mxu0 0.0
        %516 = vmatpush1.msra.mxu0 0.0
        %517 = vmatprep.subr.mxu0 0.0
        %518 = vmatpush1.msra.mxu0 0.0
        %519 = vmatprep.subr.mxu0 0.0
        %520 = vmatpush1.msra.mxu0 0.0
        %521 = vmatprep.subr.mxu0 0.0
        %522 = vmatpush1.msra.mxu0 0.0
        %523 = vmatprep.subr.mxu0 0.0
        %524 = vmatpush1.msra.mxu0 0.0
        %525 = vmatprep.subr.mxu0 0.0
        %526 = vmatpush1.msra.mxu0 0.0
        %527 = vmatprep.subr.mxu0 0.0
        %528 = vmatpush1.msra.mxu0 0.0
        %529 = vmatprep.subr.mxu0 0.0
        %530 = vmatpush1.msra.mxu0 0.0
        %531 = vmatprep.subr.mxu0 0.0
        %532 = vmatpush1.msra.mxu0 0.0
        %533 = vmatprep.subr.mxu0 0.0
        %534 = vmatpush1.msra.mxu0 0.0
        %535 = vmatprep.subr.mxu0 0.0
        %536 = vmatpush1.msra.mxu0 0.0
        %537 = vmatprep.subr.mxu0 0.0
        %538 = vmatpush1.msra.mxu0 0.0
        %539 = vmatprep.subr.mxu0 0.0
        %540 = vmatpush1.msra.mxu0 0.0
        %541 = vmatprep.subr.mxu0 0.0
        %542 = vmatpush1.msra.mxu0 0.0
        %543 = vmatprep.subr.mxu0 0.0
        %544 = vmatpush1.msra.mxu0 0.0
        %545 = vmatprep.subr.mxu0 0.0
        %546 = vmatpush1.msra.mxu0 0.0
        %547 = vmatprep.subr.mxu0 0.0
        %548 = vmatpush1.msra.mxu0 0.0
        %549 = vmatprep.subr.mxu0 0.0
        %550 = vmatpush1.msra.mxu0 0.0
        %551 = vmatprep.subr.mxu0 0.0
        %552 = vmatpush1.msra.mxu0 0.0
        %553 = vmatprep.mubr.f32.mxu0 0.0
        %554 = vmatmul.mubr.f32.gmra.mrb[0].mxu0 %v409
        %v555 = vpop.f32.mrb[0].mxu0
        %v556 = vadd.f32 0.0, %v555
        %v557 = vpop.f32.mrb[0].mxu0
        %558 = vdwg.mxu0
        %v561 = vsel %vm407, %v385, 0
        %v563 = vsel %vm411, %v386, 0
        %v565 = vsel %vm411, %v393, 0
        %v567 = vsel %vm411, %v387, 0
        %569 = vmatprep.subr.mxu0 %v565
        %570 = vmatpush1.msra.mxu0 %v563
        %571 = vmatprep.subr.mxu0 0.0
        %572 = vmatpush1.msra.mxu0 0.0
        %573 = vmatprep.subr.mxu0 0.0
        %574 = vmatpush1.msra.mxu0 0.0
        %575 = vmatprep.subr.mxu0 0.0
        %576 = vmatpush1.msra.mxu0 0.0
        %577 = vmatprep.subr.mxu0 0.0
        %578 = vmatpush1.msra.mxu0 0.0
        %579 = vmatprep.subr.mxu0 0.0
        %580 = vmatpush1.msra.mxu0 0.0
        %581 = vmatprep.subr.mxu0 0.0
        %582 = vmatpush1.msra.mxu0 0.0
        %583 = vmatprep.subr.mxu0 0.0
        %584 = vmatpush1.msra.mxu0 0.0
        %585 = vmatprep.subr.mxu0 0.0
        %586 = vmatpush1.msra.mxu0 0.0
        %587 = vmatprep.subr.mxu0 0.0
        %588 = vmatpush1.msra.mxu0 0.0
        %589 = vmatprep.subr.mxu0 0.0
        %590 = vmatpush1.msra.mxu0 0.0
        %591 = vmatprep.subr.mxu0 0.0
        %592 = vmatpush1.msra.mxu0 0.0
        %593 = vmatprep.subr.mxu0 0.0
        %594 = vmatpush1.msra.mxu0 0.0
        %595 = vmatprep.subr.mxu0 0.0
        %596 = vmatpush1.msra.mxu0 0.0
        %597 = vmatprep.subr.mxu0 0.0
        %598 = vmatpush1.msra.mxu0 0.0
        %599 = vmatprep.subr.mxu0 0.0
        %600 = vmatpush1.msra.mxu0 0.0
        %601 = vmatprep.subr.mxu0 0.0
        %602 = vmatpush1.msra.mxu0 0.0
        %603 = vmatprep.subr.mxu0 0.0
        %604 = vmatpush1.msra.mxu0 0.0
        %605 = vmatprep.subr.mxu0 0.0
        %606 = vmatpush1.msra.mxu0 0.0
        %607 = vmatprep.subr.mxu0 0.0
        %608 = vmatpush1.msra.mxu0 0.0
        %609 = vmatprep.subr.mxu0 0.0
        %610 = vmatpush1.msra.mxu0 0.0
        %611 = vmatprep.subr.mxu0 0.0
        %612 = vmatpush1.msra.mxu0 0.0
        %613 = vmatprep.subr.mxu0 0.0
        %614 = vmatpush1.msra.mxu0 0.0
        %615 = vmatprep.subr.mxu0 0.0
        %616 = vmatpush1.msra.mxu0 0.0
        %617 = vmatprep.subr.mxu0 0.0
        %618 = vmatpush1.msra.mxu0 0.0
        %619 = vmatprep.subr.mxu0 0.0
        %620 = vmatpush1.msra.mxu0 0.0
        %621 = vmatprep.subr.mxu0 0.0
        %622 = vmatpush1.msra.mxu0 0.0
        %623 = vmatprep.subr.mxu0 0.0
        %624 = vmatpush1.msra.mxu0 0.0
        %625 = vmatprep.subr.mxu0 0.0
        %626 = vmatpush1.msra.mxu0 0.0
        %627 = vmatprep.subr.mxu0 0.0
        %628 = vmatpush1.msra.mxu0 0.0
        %629 = vmatprep.subr.mxu0 0.0
        %630 = vmatpush1.msra.mxu0 0.0
        %631 = vmatprep.subr.mxu0 0.0
        %632 = vmatpush1.msra.mxu0 0.0
        %633 = vmatprep.mubr.f32.mxu0 0.0
        %634 = vmatmul.mubr.f32.gmra.mrb[0].mxu0 %v561
        %v635 = vpop.f32.mrb[0].mxu0
        %v636 = vadd.f32 %v485, %v635
        %v637 = vpop.f32.mrb[0].mxu0
        %v638 = vadd.f32 %v487, %v637
        %639 = vdwg.mxu0
        %640 = vmatprep.subr.mxu0 0.0
        %641 = vmatpush1.msra.mxu0 %v567
        %642 = vmatprep.subr.mxu0 0.0
        %643 = vmatpush1.msra.mxu0 0.0
        %644 = vmatprep.subr.mxu0 0.0
        %645 = vmatpush1.msra.mxu0 0.0
        %646 = vmatprep.subr.mxu0 0.0
        %647 = vmatpush1.msra.mxu0 0.0
        %648 = vmatprep.subr.mxu0 0.0
        %649 = vmatpush1.msra.mxu0 0.0
        %650 = vmatprep.subr.mxu0 0.0
        %651 = vmatpush1.msra.mxu0 0.0
        %652 = vmatprep.subr.mxu0 0.0
        %653 = vmatpush1.msra.mxu0 0.0
        %654 = vmatprep.subr.mxu0 0.0
        %655 = vmatpush1.msra.mxu0 0.0
        %656 = vmatprep.subr.mxu0 0.0
        %657 = vmatpush1.msra.mxu0 0.0
        %658 = vmatprep.subr.mxu0 0.0
        %659 = vmatpush1.msra.mxu0 0.0
        %660 = vmatprep.subr.mxu0 0.0
        %661 = vmatpush1.msra.mxu0 0.0
        %662 = vmatprep.subr.mxu0 0.0
        %663 = vmatpush1.msra.mxu0 0.0
        %664 = vmatprep.subr.mxu0 0.0
        %665 = vmatpush1.msra.mxu0 0.0
        %666 = vmatprep.subr.mxu0 0.0
        %667 = vmatpush1.msra.mxu0 0.0
        %668 = vmatprep.subr.mxu0 0.0
        %669 = vmatpush1.msra.mxu0 0.0
        %670 = vmatprep.subr.mxu0 0.0
        %671 = vmatpush1.msra.mxu0 0.0
        %672 = vmatprep.subr.mxu0 0.0
        %673 = vmatpush1.msra.mxu0 0.0
        %674 = vmatprep.subr.mxu0 0.0
        %675 = vmatpush1.msra.mxu0 0.0
        %676 = vmatprep.subr.mxu0 0.0
        %677 = vmatpush1.msra.mxu0 0.0
        %678 = vmatprep.subr.mxu0 0.0
        %679 = vmatpush1.msra.mxu0 0.0
        %680 = vmatprep.subr.mxu0 0.0
        %681 = vmatpush1.msra.mxu0 0.0
        %682 = vmatprep.subr.mxu0 0.0
        %683 = vmatpush1.msra.mxu0 0.0
        %684 = vmatprep.subr.mxu0 0.0
        %685 = vmatpush1.msra.mxu0 0.0
        %686 = vmatprep.subr.mxu0 0.0
        %687 = vmatpush1.msra.mxu0 0.0
        %688 = vmatprep.subr.mxu0 0.0
        %689 = vmatpush1.msra.mxu0 0.0
        %690 = vmatprep.subr.mxu0 0.0
        %691 = vmatpush1.msra.mxu0 0.0
        %692 = vmatprep.subr.mxu0 0.0
        %693 = vmatpush1.msra.mxu0 0.0
        %694 = vmatprep.subr.mxu0 0.0
        %695 = vmatpush1.msra.mxu0 0.0
        %696 = vmatprep.subr.mxu0 0.0
        %697 = vmatpush1.msra.mxu0 0.0
        %698 = vmatprep.subr.mxu0 0.0
        %699 = vmatpush1.msra.mxu0 0.0
        %700 = vmatprep.subr.mxu0 0.0
        %701 = vmatpush1.msra.mxu0 0.0
        %702 = vmatprep.subr.mxu0 0.0
        %703 = vmatpush1.msra.mxu0 0.0
        %704 = vmatprep.mubr.f32.mxu0 0.0
        %705 = vmatmul.mubr.f32.gmra.mrb[0].mxu0 %v561
        %v706 = vpop.f32.mrb[0].mxu0
        %v707 = vadd.f32 %v556, %v706
        %v708 = vpop.f32.mrb[0].mxu0
        %709 = vdwg.mxu0
        %s710 = scalar_lea.vmem %s4, 16
        %v711 = vld [vmem:[%s710] sm:$0xff]
        %v712 = vld [vmem:[%s371] sm:$0xff]
        %v713 = vld [vmem:[%s371 + $0x8] sm:$0xff]
        %v716 = vcombine.high %v712, %v712
        %v717 = vcombine.high %v713, %v713
        %718 = vrot.lane.b32.xlu0 %v712, 126
        %v719 = vpop.permute.xlu0 %718
        %720 = vrot.lane.b32.xlu0 %v716, 126
        %v721 = vpop.permute.xlu0 %720
        %722 = vrot.lane.b32.xlu0 %v713, 126
        %v723 = vpop.permute.xlu0 %722
        %724 = vrot.lane.b32.xlu0 %v717, 126
        %v725 = vpop.permute.xlu0 %724
        %vm726 = vcmask 1031168
        %v727 = vsel %vm726, %v719, %v721
        %v728 = vsel %vm726, %v721, %v723
        %v729 = vsel %vm726, %v723, %v725
        %v731 = vsel %vm407, %v711, 0
        %v733 = vsel %vm411, %v727, 0
        %v735 = vsel %vm411, %v728, 0
        %v737 = vsel %vm411, %v729, 0
        %739 = vmatprep.subr.mxu0 %v735
        %740 = vmatpush1.msra.mxu0 %v733
        %741 = vmatprep.subr.mxu0 0.0
        %742 = vmatpush1.msra.mxu0 0.0
        %743 = vmatprep.subr.mxu0 0.0
        %744 = vmatpush1.msra.mxu0 0.0
        %745 = vmatprep.subr.mxu0 0.0
        %746 = vmatpush1.msra.mxu0 0.0
        %747 = vmatprep.subr.mxu0 0.0
        %748 = vmatpush1.msra.mxu0 0.0
        %749 = vmatprep.subr.mxu0 0.0
        %750 = vmatpush1.msra.mxu0 0.0
        %751 = vmatprep.subr.mxu0 0.0
        %752 = vmatpush1.msra.mxu0 0.0
        %753 = vmatprep.subr.mxu0 0.0
        %754 = vmatpush1.msra.mxu0 0.0
        %755 = vmatprep.subr.mxu0 0.0
        %756 = vmatpush1.msra.mxu0 0.0
        %757 = vmatprep.subr.mxu0 0.0
        %758 = vmatpush1.msra.mxu0 0.0
        %759 = vmatprep.subr.mxu0 0.0
        %760 = vmatpush1.msra.mxu0 0.0
        %761 = vmatprep.subr.mxu0 0.0
        %762 = vmatpush1.msra.mxu0 0.0
        %763 = vmatprep.subr.mxu0 0.0
        %764 = vmatpush1.msra.mxu0 0.0
        %765 = vmatprep.subr.mxu0 0.0
        %766 = vmatpush1.msra.mxu0 0.0
        %767 = vmatprep.subr.mxu0 0.0
        %768 = vmatpush1.msra.mxu0 0.0
        %769 = vmatprep.subr.mxu0 0.0
        %770 = vmatpush1.msra.mxu0 0.0
        %771 = vmatprep.subr.mxu0 0.0
        %772 = vmatpush1.msra.mxu0 0.0
        %773 = vmatprep.subr.mxu0 0.0
        %774 = vmatpush1.msra.mxu0 0.0
        %775 = vmatprep.subr.mxu0 0.0
        %776 = vmatpush1.msra.mxu0 0.0
        %777 = vmatprep.subr.mxu0 0.0
        %778 = vmatpush1.msra.mxu0 0.0
        %779 = vmatprep.subr.mxu0 0.0
        %780 = vmatpush1.msra.mxu0 0.0
        %781 = vmatprep.subr.mxu0 0.0
        %782 = vmatpush1.msra.mxu0 0.0
        %783 = vmatprep.subr.mxu0 0.0
        %784 = vmatpush1.msra.mxu0 0.0
        %785 = vmatprep.subr.mxu0 0.0
        %786 = vmatpush1.msra.mxu0 0.0
        %787 = vmatprep.subr.mxu0 0.0
        %788 = vmatpush1.msra.mxu0 0.0
        %789 = vmatprep.subr.mxu0 0.0
        %790 = vmatpush1.msra.mxu0 0.0
        %791 = vmatprep.subr.mxu0 0.0
        %792 = vmatpush1.msra.mxu0 0.0
        %793 = vmatprep.subr.mxu0 0.0
        %794 = vmatpush1.msra.mxu0 0.0
        %795 = vmatprep.subr.mxu0 0.0
        %796 = vmatpush1.msra.mxu0 0.0
        %797 = vmatprep.subr.mxu0 0.0
        %798 = vmatpush1.msra.mxu0 0.0
        %799 = vmatprep.subr.mxu0 0.0
        %800 = vmatpush1.msra.mxu0 0.0
        %801 = vmatprep.subr.mxu0 0.0
        %802 = vmatpush1.msra.mxu0 0.0
        %803 = vmatprep.mubr.f32.mxu0 0.0
        %804 = vmatmul.mubr.f32.gmra.mrb[0].mxu0 %v731
        %v805 = vpop.f32.mrb[0].mxu0
        %v806 = vadd.f32 0.0, %v805
        %v807 = vpop.f32.mrb[0].mxu0
        %v808 = vadd.f32 0.0, %v807
        %809 = vdwg.mxu0
        %810 = vmatprep.subr.mxu0 0.0
        %811 = vmatpush1.msra.mxu0 %v737
        %812 = vmatprep.subr.mxu0 0.0
        %813 = vmatpush1.msra.mxu0 0.0
        %814 = vmatprep.subr.mxu0 0.0
        %815 = vmatpush1.msra.mxu0 0.0
        %816 = vmatprep.subr.mxu0 0.0
        %817 = vmatpush1.msra.mxu0 0.0
        %818 = vmatprep.subr.mxu0 0.0
        %819 = vmatpush1.msra.mxu0 0.0
        %820 = vmatprep.subr.mxu0 0.0
        %821 = vmatpush1.msra.mxu0 0.0
        %822 = vmatprep.subr.mxu0 0.0
        %823 = vmatpush1.msra.mxu0 0.0
        %824 = vmatprep.subr.mxu0 0.0
        %825 = vmatpush1.msra.mxu0 0.0
        %826 = vmatprep.subr.mxu0 0.0
        %827 = vmatpush1.msra.mxu0 0.0
        %828 = vmatprep.subr.mxu0 0.0
        %829 = vmatpush1.msra.mxu0 0.0
        %830 = vmatprep.subr.mxu0 0.0
        %831 = vmatpush1.msra.mxu0 0.0
        %832 = vmatprep.subr.mxu0 0.0
        %833 = vmatpush1.msra.mxu0 0.0
        %834 = vmatprep.subr.mxu0 0.0
        %835 = vmatpush1.msra.mxu0 0.0
        %836 = vmatprep.subr.mxu0 0.0
        %837 = vmatpush1.msra.mxu0 0.0
        %838 = vmatprep.subr.mxu0 0.0
        %839 = vmatpush1.msra.mxu0 0.0
        %840 = vmatprep.subr.mxu0 0.0
        %841 = vmatpush1.msra.mxu0 0.0
        %842 = vmatprep.subr.mxu0 0.0
        %843 = vmatpush1.msra.mxu0 0.0
        %844 = vmatprep.subr.mxu0 0.0
        %845 = vmatpush1.msra.mxu0 0.0
        %846 = vmatprep.subr.mxu0 0.0
        %847 = vmatpush1.msra.mxu0 0.0
        %848 = vmatprep.subr.mxu0 0.0
        %849 = vmatpush1.msra.mxu0 0.0
        %850 = vmatprep.subr.mxu0 0.0
        %851 = vmatpush1.msra.mxu0 0.0
        %852 = vmatprep.subr.mxu0 0.0
        %853 = vmatpush1.msra.mxu0 0.0
        %854 = vmatprep.subr.mxu0 0.0
        %855 = vmatpush1.msra.mxu0 0.0
        %856 = vmatprep.subr.mxu0 0.0
        %857 = vmatpush1.msra.mxu0 0.0
        %858 = vmatprep.subr.mxu0 0.0
        %859 = vmatpush1.msra.mxu0 0.0
        %860 = vmatprep.subr.mxu0 0.0
        %861 = vmatpush1.msra.mxu0 0.0
        %862 = vmatprep.subr.mxu0 0.0
        %863 = vmatpush1.msra.mxu0 0.0
        %864 = vmatprep.subr.mxu0 0.0
        %865 = vmatpush1.msra.mxu0 0.0
        %866 = vmatprep.subr.mxu0 0.0
        %867 = vmatpush1.msra.mxu0 0.0
        %868 = vmatprep.subr.mxu0 0.0
        %869 = vmatpush1.msra.mxu0 0.0
        %870 = vmatprep.subr.mxu0 0.0
        %871 = vmatpush1.msra.mxu0 0.0
        %872 = vmatprep.subr.mxu0 0.0
        %873 = vmatpush1.msra.mxu0 0.0
        %874 = vmatprep.mubr.f32.mxu0 0.0
        %875 = vmatmul.mubr.f32.gmra.mrb[0].mxu0 %v731
        %v876 = vpop.f32.mrb[0].mxu0
        %v877 = vadd.f32 0.0, %v876
        %v878 = vpop.f32.mrb[0].mxu0
        %879 = vdwg.mxu0
        %v880 = vadd.f32 %v636, %v806
        %v881 = vadd.f32 %v638, %v808
        %v882 = vadd.f32 %v707, %v877
        %s883 = scalar_lea.vmem %s4, 24
        %v884 = vld [vmem:[%s883] sm:$0xff]
        %v885 = vld [vmem:[%s371] sm:$0xff]
        %v886 = vld [vmem:[%s371 + $0x8] sm:$0xff]
        %v889 = vcombine.high %v885, %v885
        %v890 = vcombine.high %v886, %v886
        %891 = vrot.lane.b32.xlu0 %v885, 110
        %v892 = vpop.permute.xlu0 %891
        %893 = vrot.lane.b32.xlu0 %v889, 110
        %v894 = vpop.permute.xlu0 %893
        %895 = vrot.lane.b32.xlu0 %v886, 110
        %v896 = vpop.permute.xlu0 %895
        %897 = vrot.lane.b32.xlu0 %v890, 110
        %v898 = vpop.permute.xlu0 %897
        %vm899 = vcmask 900096
        %v900 = vsel %vm899, %v892, %v894
        %v901 = vsel %vm899, %v894, %v896
        %v902 = vsel %vm899, %v896, %v898
        %v904 = vsel %vm407, %v884, 0
        %v906 = vsel %vm411, %v900, 0
        %v908 = vsel %vm411, %v901, 0
        %v910 = vsel %vm411, %v902, 0
        %912 = vmatprep.subr.mxu0 %v908
        %913 = vmatpush1.msra.mxu0 %v906
        %914 = vmatprep.subr.mxu0 0.0
        %915 = vmatpush1.msra.mxu0 0.0
        %916 = vmatprep.subr.mxu0 0.0
        %917 = vmatpush1.msra.mxu0 0.0
        %918 = vmatprep.subr.mxu0 0.0
        %919 = vmatpush1.msra.mxu0 0.0
        %920 = vmatprep.subr.mxu0 0.0
        %921 = vmatpush1.msra.mxu0 0.0
        %922 = vmatprep.subr.mxu0 0.0
        %923 = vmatpush1.msra.mxu0 0.0
        %924 = vmatprep.subr.mxu0 0.0
        %925 = vmatpush1.msra.mxu0 0.0
        %926 = vmatprep.subr.mxu0 0.0
        %927 = vmatpush1.msra.mxu0 0.0
        %928 = vmatprep.subr.mxu0 0.0
        %929 = vmatpush1.msra.mxu0 0.0
        %930 = vmatprep.subr.mxu0 0.0
        %931 = vmatpush1.msra.mxu0 0.0
        %932 = vmatprep.subr.mxu0 0.0
        %933 = vmatpush1.msra.mxu0 0.0
        %934 = vmatprep.subr.mxu0 0.0
        %935 = vmatpush1.msra.mxu0 0.0
        %936 = vmatprep.subr.mxu0 0.0
        %937 = vmatpush1.msra.mxu0 0.0
        %938 = vmatprep.subr.mxu0 0.0
        %939 = vmatpush1.msra.mxu0 0.0
        %940 = vmatprep.subr.mxu0 0.0
        %941 = vmatpush1.msra.mxu0 0.0
        %942 = vmatprep.subr.mxu0 0.0
        %943 = vmatpush1.msra.mxu0 0.0
        %944 = vmatprep.subr.mxu0 0.0
        %945 = vmatpush1.msra.mxu0 0.0
        %946 = vmatprep.subr.mxu0 0.0
        %947 = vmatpush1.msra.mxu0 0.0
        %948 = vmatprep.subr.mxu0 0.0
        %949 = vmatpush1.msra.mxu0 0.0
        %950 = vmatprep.subr.mxu0 0.0
        %951 = vmatpush1.msra.mxu0 0.0
        %952 = vmatprep.subr.mxu0 0.0
        %953 = vmatpush1.msra.mxu0 0.0
        %954 = vmatprep.subr.mxu0 0.0
        %955 = vmatpush1.msra.mxu0 0.0
        %956 = vmatprep.subr.mxu0 0.0
        %957 = vmatpush1.msra.mxu0 0.0
        %958 = vmatprep.subr.mxu0 0.0
        %959 = vmatpush1.msra.mxu0 0.0
        %960 = vmatprep.subr.mxu0 0.0
        %961 = vmatpush1.msra.mxu0 0.0
        %962 = vmatprep.subr.mxu0 0.0
        %963 = vmatpush1.msra.mxu0 0.0
        %964 = vmatprep.subr.mxu0 0.0
        %965 = vmatpush1.msra.mxu0 0.0
        %966 = vmatprep.subr.mxu0 0.0
        %967 = vmatpush1.msra.mxu0 0.0
        %968 = vmatprep.subr.mxu0 0.0
        %969 = vmatpush1.msra.mxu0 0.0
        %970 = vmatprep.subr.mxu0 0.0
        %971 = vmatpush1.msra.mxu0 0.0
        %972 = vmatprep.subr.mxu0 0.0
        %973 = vmatpush1.msra.mxu0 0.0
        %974 = vmatprep.subr.mxu0 0.0
        %975 = vmatpush1.msra.mxu0 0.0
        %976 = vmatprep.mubr.f32.mxu0 0.0
        %977 = vmatmul.mubr.f32.gmra.mrb[0].mxu0 %v904
        %v978 = vpop.f32.mrb[0].mxu0
        %v979 = vadd.f32 0.0, %v978
        %v980 = vpop.f32.mrb[0].mxu0
        %v981 = vadd.f32 0.0, %v980
        %982 = vdwg.mxu0
        %983 = vmatprep.subr.mxu0 0.0
        %984 = vmatpush1.msra.mxu0 %v910
        %985 = vmatprep.subr.mxu0 0.0
        %986 = vmatpush1.msra.mxu0 0.0
        %987 = vmatprep.subr.mxu0 0.0
        %988 = vmatpush1.msra.mxu0 0.0
        %989 = vmatprep.subr.mxu0 0.0
        %990 = vmatpush1.msra.mxu0 0.0
        %991 = vmatprep.subr.mxu0 0.0
        %992 = vmatpush1.msra.mxu0 0.0
        %993 = vmatprep.subr.mxu0 0.0
        %994 = vmatpush1.msra.mxu0 0.0
        %995 = vmatprep.subr.mxu0 0.0
        %996 = vmatpush1.msra.mxu0 0.0
        %997 = vmatprep.subr.mxu0 0.0
        %998 = vmatpush1.msra.mxu0 0.0
        %999 = vmatprep.subr.mxu0 0.0
        %1000 = vmatpush1.msra.mxu0 0.0
        %1001 = vmatprep.subr.mxu0 0.0
        %1002 = vmatpush1.msra.mxu0 0.0
        %1003 = vmatprep.subr.mxu0 0.0
        %1004 = vmatpush1.msra.mxu0 0.0
        %1005 = vmatprep.subr.mxu0 0.0
        %1006 = vmatpush1.msra.mxu0 0.0
        %1007 = vmatprep.subr.mxu0 0.0
        %1008 = vmatpush1.msra.mxu0 0.0
        %1009 = vmatprep.subr.mxu0 0.0
        %1010 = vmatpush1.msra.mxu0 0.0
        %1011 = vmatprep.subr.mxu0 0.0
        %1012 = vmatpush1.msra.mxu0 0.0
        %1013 = vmatprep.subr.mxu0 0.0
        %1014 = vmatpush1.msra.mxu0 0.0
        %1015 = vmatprep.subr.mxu0 0.0
        %1016 = vmatpush1.msra.mxu0 0.0
        %1017 = vmatprep.subr.mxu0 0.0
        %1018 = vmatpush1.msra.mxu0 0.0
        %1019 = vmatprep.subr.mxu0 0.0
        %1020 = vmatpush1.msra.mxu0 0.0
        %1021 = vmatprep.subr.mxu0 0.0
        %1022 = vmatpush1.msra.mxu0 0.0
        %1023 = vmatprep.subr.mxu0 0.0
        %1024 = vmatpush1.msra.mxu0 0.0
        %1025 = vmatprep.subr.mxu0 0.0
        %1026 = vmatpush1.msra.mxu0 0.0
        %1027 = vmatprep.subr.mxu0 0.0
        %1028 = vmatpush1.msra.mxu0 0.0
        %1029 = vmatprep.subr.mxu0 0.0
        %1030 = vmatpush1.msra.mxu0 0.0
        %1031 = vmatprep.subr.mxu0 0.0
        %1032 = vmatpush1.msra.mxu0 0.0
        %1033 = vmatprep.subr.mxu0 0.0
        %1034 = vmatpush1.msra.mxu0 0.0
        %1035 = vmatprep.subr.mxu0 0.0
        %1036 = vmatpush1.msra.mxu0 0.0
        %1037 = vmatprep.subr.mxu0 0.0
        %1038 = vmatpush1.msra.mxu0 0.0
        %1039 = vmatprep.subr.mxu0 0.0
        %1040 = vmatpush1.msra.mxu0 0.0
        %1041 = vmatprep.subr.mxu0 0.0
        %1042 = vmatpush1.msra.mxu0 0.0
        %1043 = vmatprep.subr.mxu0 0.0
        %1044 = vmatpush1.msra.mxu0 0.0
        %1045 = vmatprep.subr.mxu0 0.0
        %1046 = vmatpush1.msra.mxu0 0.0
        %1047 = vmatprep.mubr.f32.mxu0 0.0
        %1048 = vmatmul.mubr.f32.gmra.mrb[0].mxu0 %v904
        %v1049 = vpop.f32.mrb[0].mxu0
        %v1050 = vadd.f32 0.0, %v1049
        %v1051 = vpop.f32.mrb[0].mxu0
        %1052 = vdwg.mxu0
        %v1053 = vadd.f32 %v880, %v979
        %v1054 = vadd.f32 %v881, %v981
        %v1055 = vadd.f32 %v882, %v1050
        %s1056 = scalar_lea.vmem %s4, 32
        %v1057 = vld [vmem:[%s1056] sm:$0xff]
        %v1058 = vld [vmem:[%s371] sm:$0xff]
        %v1059 = vld [vmem:[%s371 + $0x8] sm:$0xff]
        %v1062 = vcombine.high %v1058, %v1058
        %v1063 = vcombine.high %v1059, %v1059
        %1064 = vrot.lane.b32.xlu0 %v1058, 109
        %v1065 = vpop.permute.xlu0 %1064
        %1066 = vrot.lane.b32.xlu0 %v1062, 109
        %v1067 = vpop.permute.xlu0 %1066
        %1068 = vrot.lane.b32.xlu0 %v1059, 109
        %v1069 = vpop.permute.xlu0 %1068
        %1070 = vrot.lane.b32.xlu0 %v1063, 109
        %v1071 = vpop.permute.xlu0 %1070
        %vm1072 = vcmask 891904
        %v1073 = vsel %vm1072, %v1065, %v1067
        %v1074 = vsel %vm1072, %v1067, %v1069
        %v1075 = vsel %vm1072, %v1069, %v1071
        %v1077 = vsel %vm407, %v1057, 0
        %v1079 = vsel %vm411, %v1073, 0
        %v1081 = vsel %vm411, %v1074, 0
        %v1083 = vsel %vm411, %v1075, 0
        %1085 = vmatprep.subr.mxu0 %v1081
        %1086 = vmatpush1.msra.mxu0 %v1079
        %1087 = vmatprep.subr.mxu0 0.0
        %1088 = vmatpush1.msra.mxu0 0.0
        %1089 = vmatprep.subr.mxu0 0.0
        %1090 = vmatpush1.msra.mxu0 0.0
        %1091 = vmatprep.subr.mxu0 0.0
        %1092 = vmatpush1.msra.mxu0 0.0
        %1093 = vmatprep.subr.mxu0 0.0
        %1094 = vmatpush1.msra.mxu0 0.0
        %1095 = vmatprep.subr.mxu0 0.0
        %1096 = vmatpush1.msra.mxu0 0.0
        %1097 = vmatprep.subr.mxu0 0.0
        %1098 = vmatpush1.msra.mxu0 0.0
        %1099 = vmatprep.subr.mxu0 0.0
        %1100 = vmatpush1.msra.mxu0 0.0
        %1101 = vmatprep.subr.mxu0 0.0
        %1102 = vmatpush1.msra.mxu0 0.0
        %1103 = vmatprep.subr.mxu0 0.0
        %1104 = vmatpush1.msra.mxu0 0.0
        %1105 = vmatprep.subr.mxu0 0.0
        %1106 = vmatpush1.msra.mxu0 0.0
        %1107 = vmatprep.subr.mxu0 0.0
        %1108 = vmatpush1.msra.mxu0 0.0
        %1109 = vmatprep.subr.mxu0 0.0
        %1110 = vmatpush1.msra.mxu0 0.0
        %1111 = vmatprep.subr.mxu0 0.0
        %1112 = vmatpush1.msra.mxu0 0.0
        %1113 = vmatprep.subr.mxu0 0.0
        %1114 = vmatpush1.msra.mxu0 0.0
        %1115 = vmatprep.subr.mxu0 0.0
        %1116 = vmatpush1.msra.mxu0 0.0
        %1117 = vmatprep.subr.mxu0 0.0
        %1118 = vmatpush1.msra.mxu0 0.0
        %1119 = vmatprep.subr.mxu0 0.0
        %1120 = vmatpush1.msra.mxu0 0.0
        %1121 = vmatprep.subr.mxu0 0.0
        %1122 = vmatpush1.msra.mxu0 0.0
        %1123 = vmatprep.subr.mxu0 0.0
        %1124 = vmatpush1.msra.mxu0 0.0
        %1125 = vmatprep.subr.mxu0 0.0
        %1126 = vmatpush1.msra.mxu0 0.0
        %1127 = vmatprep.subr.mxu0 0.0
        %1128 = vmatpush1.msra.mxu0 0.0
        %1129 = vmatprep.subr.mxu0 0.0
        %1130 = vmatpush1.msra.mxu0 0.0
        %1131 = vmatprep.subr.mxu0 0.0
        %1132 = vmatpush1.msra.mxu0 0.0
        %1133 = vmatprep.subr.mxu0 0.0
        %1134 = vmatpush1.msra.mxu0 0.0
        %1135 = vmatprep.subr.mxu0 0.0
        %1136 = vmatpush1.msra.mxu0 0.0
        %1137 = vmatprep.subr.mxu0 0.0
        %1138 = vmatpush1.msra.mxu0 0.0
        %1139 = vmatprep.subr.mxu0 0.0
        %1140 = vmatpush1.msra.mxu0 0.0
        %1141 = vmatprep.subr.mxu0 0.0
        %1142 = vmatpush1.msra.mxu0 0.0
        %1143 = vmatprep.subr.mxu0 0.0
        %1144 = vmatpush1.msra.mxu0 0.0
        %1145 = vmatprep.subr.mxu0 0.0
        %1146 = vmatpush1.msra.mxu0 0.0
        %1147 = vmatprep.subr.mxu0 0.0
        %1148 = vmatpush1.msra.mxu0 0.0
        %1149 = vmatprep.mubr.f32.mxu0 0.0
        %1150 = vmatmul.mubr.f32.gmra.mrb[0].mxu0 %v1077
        %v1151 = vpop.f32.mrb[0].mxu0
        %v1152 = vadd.f32 0.0, %v1151
        %v1153 = vpop.f32.mrb[0].mxu0
        %v1154 = vadd.f32 0.0, %v1153
        %1155 = vdwg.mxu0
        %1156 = vmatprep.subr.mxu0 0.0
        %1157 = vmatpush1.msra.mxu0 %v1083
        %1158 = vmatprep.subr.mxu0 0.0
        %1159 = vmatpush1.msra.mxu0 0.0
        %1160 = vmatprep.subr.mxu0 0.0
        %1161 = vmatpush1.msra.mxu0 0.0
        %1162 = vmatprep.subr.mxu0 0.0
        %1163 = vmatpush1.msra.mxu0 0.0
        %1164 = vmatprep.subr.mxu0 0.0
        %1165 = vmatpush1.msra.mxu0 0.0
        %1166 = vmatprep.subr.mxu0 0.0
        %1167 = vmatpush1.msra.mxu0 0.0
        %1168 = vmatprep.subr.mxu0 0.0
        %1169 = vmatpush1.msra.mxu0 0.0
        %1170 = vmatprep.subr.mxu0 0.0
        %1171 = vmatpush1.msra.mxu0 0.0
        %1172 = vmatprep.subr.mxu0 0.0
        %1173 = vmatpush1.msra.mxu0 0.0
        %1174 = vmatprep.subr.mxu0 0.0
        %1175 = vmatpush1.msra.mxu0 0.0
        %1176 = vmatprep.subr.mxu0 0.0
        %1177 = vmatpush1.msra.mxu0 0.0
        %1178 = vmatprep.subr.mxu0 0.0
        %1179 = vmatpush1.msra.mxu0 0.0
        %1180 = vmatprep.subr.mxu0 0.0
        %1181 = vmatpush1.msra.mxu0 0.0
        %1182 = vmatprep.subr.mxu0 0.0
        %1183 = vmatpush1.msra.mxu0 0.0
        %1184 = vmatprep.subr.mxu0 0.0
        %1185 = vmatpush1.msra.mxu0 0.0
        %1186 = vmatprep.subr.mxu0 0.0
        %1187 = vmatpush1.msra.mxu0 0.0
        %1188 = vmatprep.subr.mxu0 0.0
        %1189 = vmatpush1.msra.mxu0 0.0
        %1190 = vmatprep.subr.mxu0 0.0
        %1191 = vmatpush1.msra.mxu0 0.0
        %1192 = vmatprep.subr.mxu0 0.0
        %1193 = vmatpush1.msra.mxu0 0.0
        %1194 = vmatprep.subr.mxu0 0.0
        %1195 = vmatpush1.msra.mxu0 0.0
        %1196 = vmatprep.subr.mxu0 0.0
        %1197 = vmatpush1.msra.mxu0 0.0
        %1198 = vmatprep.subr.mxu0 0.0
        %1199 = vmatpush1.msra.mxu0 0.0
        %1200 = vmatprep.subr.mxu0 0.0
        %1201 = vmatpush1.msra.mxu0 0.0
        %1202 = vmatprep.subr.mxu0 0.0
        %1203 = vmatpush1.msra.mxu0 0.0
        %1204 = vmatprep.subr.mxu0 0.0
        %1205 = vmatpush1.msra.mxu0 0.0
        %1206 = vmatprep.subr.mxu0 0.0
        %1207 = vmatpush1.msra.mxu0 0.0
        %1208 = vmatprep.subr.mxu0 0.0
        %1209 = vmatpush1.msra.mxu0 0.0
        %1210 = vmatprep.subr.mxu0 0.0
        %1211 = vmatpush1.msra.mxu0 0.0
        %1212 = vmatprep.subr.mxu0 0.0
        %1213 = vmatpush1.msra.mxu0 0.0
        %1214 = vmatprep.subr.mxu0 0.0
        %1215 = vmatpush1.msra.mxu0 0.0
        %1216 = vmatprep.subr.mxu0 0.0
        %1217 = vmatpush1.msra.mxu0 0.0
        %1218 = vmatprep.subr.mxu0 0.0
        %1219 = vmatpush1.msra.mxu0 0.0
        %1220 = vmatprep.mubr.f32.mxu0 0.0
        %1221 = vmatmul.mubr.f32.gmra.mrb[0].mxu0 %v1077
        %v1222 = vpop.f32.mrb[0].mxu0
        %v1223 = vadd.f32 0.0, %v1222
        %v1224 = vpop.f32.mrb[0].mxu0
        %1225 = vdwg.mxu0
        %v1226 = vadd.f32 %v1053, %v1152
        %v1227 = vadd.f32 %v1054, %v1154
        %v1228 = vadd.f32 %v1055, %v1223
        %s1229 = scalar_lea.vmem %s4, 40
        %v1230 = vld [vmem:[%s1229] sm:$0xff]
        %v1231 = vld [vmem:[%s371] sm:$0xff]
        %v1232 = vld [vmem:[%s371 + $0x8] sm:$0xff]
        %v1235 = vcombine.high %v1231, %v1231
        %v1236 = vcombine.high %v1232, %v1232
        %1237 = vrot.lane.b32.xlu0 %v1231, 108
        %v1238 = vpop.permute.xlu0 %1237
        %1239 = vrot.lane.b32.xlu0 %v1235, 108
        %v1240 = vpop.permute.xlu0 %1239
        %1241 = vrot.lane.b32.xlu0 %v1232, 108
        %v1242 = vpop.permute.xlu0 %1241
        %1243 = vrot.lane.b32.xlu0 %v1236, 108
        %v1244 = vpop.permute.xlu0 %1243
        %vm1245 = vcmask 883712
        %v1246 = vsel %vm1245, %v1238, %v1240
        %v1247 = vsel %vm1245, %v1240, %v1242
        %v1248 = vsel %vm1245, %v1242, %v1244
        %v1250 = vsel %vm407, %v1230, 0
        %v1252 = vsel %vm411, %v1246, 0
        %v1254 = vsel %vm411, %v1247, 0
        %v1256 = vsel %vm411, %v1248, 0
        %1258 = vmatprep.subr.mxu0 %v1254
        %1259 = vmatpush1.msra.mxu0 %v1252
        %1260 = vmatprep.subr.mxu0 0.0
        %1261 = vmatpush1.msra.mxu0 0.0
        %1262 = vmatprep.subr.mxu0 0.0
        %1263 = vmatpush1.msra.mxu0 0.0
        %1264 = vmatprep.subr.mxu0 0.0
        %1265 = vmatpush1.msra.mxu0 0.0
        %1266 = vmatprep.subr.mxu0 0.0
        %1267 = vmatpush1.msra.mxu0 0.0
        %1268 = vmatprep.subr.mxu0 0.0
        %1269 = vmatpush1.msra.mxu0 0.0
        %1270 = vmatprep.subr.mxu0 0.0
        %1271 = vmatpush1.msra.mxu0 0.0
        %1272 = vmatprep.subr.mxu0 0.0
        %1273 = vmatpush1.msra.mxu0 0.0
        %1274 = vmatprep.subr.mxu0 0.0
        %1275 = vmatpush1.msra.mxu0 0.0
        %1276 = vmatprep.subr.mxu0 0.0
        %1277 = vmatpush1.msra.mxu0 0.0
        %1278 = vmatprep.subr.mxu0 0.0
        %1279 = vmatpush1.msra.mxu0 0.0
        %1280 = vmatprep.subr.mxu0 0.0
        %1281 = vmatpush1.msra.mxu0 0.0
        %1282 = vmatprep.subr.mxu0 0.0
        %1283 = vmatpush1.msra.mxu0 0.0
        %1284 = vmatprep.subr.mxu0 0.0
        %1285 = vmatpush1.msra.mxu0 0.0
        %1286 = vmatprep.subr.mxu0 0.0
        %1287 = vmatpush1.msra.mxu0 0.0
        %1288 = vmatprep.subr.mxu0 0.0
        %1289 = vmatpush1.msra.mxu0 0.0
        %1290 = vmatprep.subr.mxu0 0.0
        %1291 = vmatpush1.msra.mxu0 0.0
        %1292 = vmatprep.subr.mxu0 0.0
        %1293 = vmatpush1.msra.mxu0 0.0
        %1294 = vmatprep.subr.mxu0 0.0
        %1295 = vmatpush1.msra.mxu0 0.0
        %1296 = vmatprep.subr.mxu0 0.0
        %1297 = vmatpush1.msra.mxu0 0.0
        %1298 = vmatprep.subr.mxu0 0.0
        %1299 = vmatpush1.msra.mxu0 0.0
        %1300 = vmatprep.subr.mxu0 0.0
        %1301 = vmatpush1.msra.mxu0 0.0
        %1302 = vmatprep.subr.mxu0 0.0
        %1303 = vmatpush1.msra.mxu0 0.0
        %1304 = vmatprep.subr.mxu0 0.0
        %1305 = vmatpush1.msra.mxu0 0.0
        %1306 = vmatprep.subr.mxu0 0.0
        %1307 = vmatpush1.msra.mxu0 0.0
        %1308 = vmatprep.subr.mxu0 0.0
        %1309 = vmatpush1.msra.mxu0 0.0
        %1310 = vmatprep.subr.mxu0 0.0
        %1311 = vmatpush1.msra.mxu0 0.0
        %1312 = vmatprep.subr.mxu0 0.0
        %1313 = vmatpush1.msra.mxu0 0.0
        %1314 = vmatprep.subr.mxu0 0.0
        %1315 = vmatpush1.msra.mxu0 0.0
        %1316 = vmatprep.subr.mxu0 0.0
        %1317 = vmatpush1.msra.mxu0 0.0
        %1318 = vmatprep.subr.mxu0 0.0
        %1319 = vmatpush1.msra.mxu0 0.0
        %1320 = vmatprep.subr.mxu0 0.0
        %1321 = vmatpush1.msra.mxu0 0.0
        %1322 = vmatprep.mubr.f32.mxu0 0.0
        %1323 = vmatmul.mubr.f32.gmra.mrb[0].mxu0 %v1250
        %v1324 = vpop.f32.mrb[0].mxu0
        %v1325 = vadd.f32 0.0, %v1324
        %v1326 = vpop.f32.mrb[0].mxu0
        %v1327 = vadd.f32 0.0, %v1326
        %1328 = vdwg.mxu0
        %1329 = vmatprep.subr.mxu0 0.0
        %1330 = vmatpush1.msra.mxu0 %v1256
        %1331 = vmatprep.subr.mxu0 0.0
        %1332 = vmatpush1.msra.mxu0 0.0
        %1333 = vmatprep.subr.mxu0 0.0
        %1334 = vmatpush1.msra.mxu0 0.0
        %1335 = vmatprep.subr.mxu0 0.0
        %1336 = vmatpush1.msra.mxu0 0.0
        %1337 = vmatprep.subr.mxu0 0.0
        %1338 = vmatpush1.msra.mxu0 0.0
        %1339 = vmatprep.subr.mxu0 0.0
        %1340 = vmatpush1.msra.mxu0 0.0
        %1341 = vmatprep.subr.mxu0 0.0
        %1342 = vmatpush1.msra.mxu0 0.0
        %1343 = vmatprep.subr.mxu0 0.0
        %1344 = vmatpush1.msra.mxu0 0.0
        %1345 = vmatprep.subr.mxu0 0.0
        %1346 = vmatpush1.msra.mxu0 0.0
        %1347 = vmatprep.subr.mxu0 0.0
        %1348 = vmatpush1.msra.mxu0 0.0
        %1349 = vmatprep.subr.mxu0 0.0
        %1350 = vmatpush1.msra.mxu0 0.0
        %1351 = vmatprep.subr.mxu0 0.0
        %1352 = vmatpush1.msra.mxu0 0.0
        %1353 = vmatprep.subr.mxu0 0.0
        %1354 = vmatpush1.msra.mxu0 0.0
        %1355 = vmatprep.subr.mxu0 0.0
        %1356 = vmatpush1.msra.mxu0 0.0
        %1357 = vmatprep.subr.mxu0 0.0
        %1358 = vmatpush1.msra.mxu0 0.0
        %1359 = vmatprep.subr.mxu0 0.0
        %1360 = vmatpush1.msra.mxu0 0.0
        %1361 = vmatprep.subr.mxu0 0.0
        %1362 = vmatpush1.msra.mxu0 0.0
        %1363 = vmatprep.subr.mxu0 0.0
        %1364 = vmatpush1.msra.mxu0 0.0
        %1365 = vmatprep.subr.mxu0 0.0
        %1366 = vmatpush1.msra.mxu0 0.0
        %1367 = vmatprep.subr.mxu0 0.0
        %1368 = vmatpush1.msra.mxu0 0.0
        %1369 = vmatprep.subr.mxu0 0.0
        %1370 = vmatpush1.msra.mxu0 0.0
        %1371 = vmatprep.subr.mxu0 0.0
        %1372 = vmatpush1.msra.mxu0 0.0
        %1373 = vmatprep.subr.mxu0 0.0
        %1374 = vmatpush1.msra.mxu0 0.0
        %1375 = vmatprep.subr.mxu0 0.0
        %1376 = vmatpush1.msra.mxu0 0.0
        %1377 = vmatprep.subr.mxu0 0.0
        %1378 = vmatpush1.msra.mxu0 0.0
        %1379 = vmatprep.subr.mxu0 0.0
        %1380 = vmatpush1.msra.mxu0 0.0
        %1381 = vmatprep.subr.mxu0 0.0
        %1382 = vmatpush1.msra.mxu0 0.0
        %1383 = vmatprep.subr.mxu0 0.0
        %1384 = vmatpush1.msra.mxu0 0.0
        %1385 = vmatprep.subr.mxu0 0.0
        %1386 = vmatpush1.msra.mxu0 0.0
        %1387 = vmatprep.subr.mxu0 0.0
        %1388 = vmatpush1.msra.mxu0 0.0
        %1389 = vmatprep.subr.mxu0 0.0
        %1390 = vmatpush1.msra.mxu0 0.0
        %1391 = vmatprep.subr.mxu0 0.0
        %1392 = vmatpush1.msra.mxu0 0.0
        %1393 = vmatprep.mubr.f32.mxu0 0.0
        %1394 = vmatmul.mubr.f32.gmra.mrb[0].mxu0 %v1250
        %v1395 = vpop.f32.mrb[0].mxu0
        %v1396 = vadd.f32 0.0, %v1395
        %v1397 = vpop.f32.mrb[0].mxu0
        %1398 = vdwg.mxu0
        %v1399 = vadd.f32 %v1226, %v1325
        %v1400 = vadd.f32 %v1227, %v1327
        %v1401 = vadd.f32 %v1228, %v1396
        %v1402 = vld [vmem:[%s5] sm:$0xff]
        %v1403 = vld [vmem:[%s376] sm:$0xff]
        %v1404 = vld [vmem:[%s376 + $0x8] sm:$0xf]
        %s1405 = scalar_lea.vmem %s5, 8
        %v1406 = vld [vmem:[%s1405] sm:$0xff]
        %v1407 = vld [vmem:[%s376 + $0x8] sm:$0xff]
        %v1410 = vcombine.high %v1403, %v1403
        %v1411 = vcombine.high %v1407, %v1407
        %1412 = vrot.lane.b32.xlu0 %v1403, 127
        %v1413 = vpop.permute.xlu0 %1412
        %1414 = vrot.lane.b32.xlu0 %v1410, 127
        %v1415 = vpop.permute.xlu0 %1414
        %1416 = vrot.lane.b32.xlu0 %v1407, 127
        %v1417 = vpop.permute.xlu0 %1416
        %1418 = vrot.lane.b32.xlu0 %v1411, 127
        %v1419 = vpop.permute.xlu0 %1418
        %v1420 = vsel %vm403, %v1413, %v1415
        %v1421 = vsel %vm403, %v1415, %v1417
        %v1422 = vsel %vm403, %v1417, %v1419
        %v1424 = vsel %vm407, %v1406, 0
        %v1426 = vsel %vm411, %v1420, 0
        %v1428 = vsel %vm411, %v1421, 0
        %v1430 = vsel %vm411, %v1422, 0
        %1432 = vmatprep.subr.mxu0 %v1428
        %1433 = vmatpush1.msra.mxu0 %v1426
        %1434 = vmatprep.subr.mxu0 0.0
        %1435 = vmatpush1.msra.mxu0 0.0
        %1436 = vmatprep.subr.mxu0 0.0
        %1437 = vmatpush1.msra.mxu0 0.0
        %1438 = vmatprep.subr.mxu0 0.0
        %1439 = vmatpush1.msra.mxu0 0.0
        %1440 = vmatprep.subr.mxu0 0.0
        %1441 = vmatpush1.msra.mxu0 0.0
        %1442 = vmatprep.subr.mxu0 0.0
        %1443 = vmatpush1.msra.mxu0 0.0
        %1444 = vmatprep.subr.mxu0 0.0
        %1445 = vmatpush1.msra.mxu0 0.0
        %1446 = vmatprep.subr.mxu0 0.0
        %1447 = vmatpush1.msra.mxu0 0.0
        %1448 = vmatprep.subr.mxu0 0.0
        %1449 = vmatpush1.msra.mxu0 0.0
        %1450 = vmatprep.subr.mxu0 0.0
        %1451 = vmatpush1.msra.mxu0 0.0
        %1452 = vmatprep.subr.mxu0 0.0
        %1453 = vmatpush1.msra.mxu0 0.0
        %1454 = vmatprep.subr.mxu0 0.0
        %1455 = vmatpush1.msra.mxu0 0.0
        %1456 = vmatprep.subr.mxu0 0.0
        %1457 = vmatpush1.msra.mxu0 0.0
        %1458 = vmatprep.subr.mxu0 0.0
        %1459 = vmatpush1.msra.mxu0 0.0
        %1460 = vmatprep.subr.mxu0 0.0
        %1461 = vmatpush1.msra.mxu0 0.0
        %1462 = vmatprep.subr.mxu0 0.0
        %1463 = vmatpush1.msra.mxu0 0.0
        %1464 = vmatprep.subr.mxu0 0.0
        %1465 = vmatpush1.msra.mxu0 0.0
        %1466 = vmatprep.subr.mxu0 0.0
        %1467 = vmatpush1.msra.mxu0 0.0
        %1468 = vmatprep.subr.mxu0 0.0
        %1469 = vmatpush1.msra.mxu0 0.0
        %1470 = vmatprep.subr.mxu0 0.0
        %1471 = vmatpush1.msra.mxu0 0.0
        %1472 = vmatprep.subr.mxu0 0.0
        %1473 = vmatpush1.msra.mxu0 0.0
        %1474 = vmatprep.subr.mxu0 0.0
        %1475 = vmatpush1.msra.mxu0 0.0
        %1476 = vmatprep.subr.mxu0 0.0
        %1477 = vmatpush1.msra.mxu0 0.0
        %1478 = vmatprep.subr.mxu0 0.0
        %1479 = vmatpush1.msra.mxu0 0.0
        %1480 = vmatprep.subr.mxu0 0.0
        %1481 = vmatpush1.msra.mxu0 0.0
        %1482 = vmatprep.subr.mxu0 0.0
        %1483 = vmatpush1.msra.mxu0 0.0
        %1484 = vmatprep.subr.mxu0 0.0
        %1485 = vmatpush1.msra.mxu0 0.0
        %1486 = vmatprep.subr.mxu0 0.0
        %1487 = vmatpush1.msra.mxu0 0.0
        %1488 = vmatprep.subr.mxu0 0.0
        %1489 = vmatpush1.msra.mxu0 0.0
        %1490 = vmatprep.subr.mxu0 0.0
        %1491 = vmatpush1.msra.mxu0 0.0
        %1492 = vmatprep.subr.mxu0 0.0
        %1493 = vmatpush1.msra.mxu0 0.0
        %1494 = vmatprep.subr.mxu0 0.0
        %1495 = vmatpush1.msra.mxu0 0.0
        %1496 = vmatprep.mubr.f32.mxu0 0.0
        %1497 = vmatmul.mubr.f32.gmra.mrb[0].mxu0 %v1424
        %v1498 = vpop.f32.mrb[0].mxu0
        %v1499 = vadd.f32 0.0, %v1498
        %v1500 = vpop.f32.mrb[0].mxu0
        %v1501 = vadd.f32 0.0, %v1500
        %1502 = vdwg.mxu0
        %1503 = vmatprep.subr.mxu0 0.0
        %1504 = vmatpush1.msra.mxu0 %v1430
        %1505 = vmatprep.subr.mxu0 0.0
        %1506 = vmatpush1.msra.mxu0 0.0
        %1507 = vmatprep.subr.mxu0 0.0
        %1508 = vmatpush1.msra.mxu0 0.0
        %1509 = vmatprep.subr.mxu0 0.0
        %1510 = vmatpush1.msra.mxu0 0.0
        %1511 = vmatprep.subr.mxu0 0.0
        %1512 = vmatpush1.msra.mxu0 0.0
        %1513 = vmatprep.subr.mxu0 0.0
        %1514 = vmatpush1.msra.mxu0 0.0
        %1515 = vmatprep.subr.mxu0 0.0
        %1516 = vmatpush1.msra.mxu0 0.0
        %1517 = vmatprep.subr.mxu0 0.0
        %1518 = vmatpush1.msra.mxu0 0.0
        %1519 = vmatprep.subr.mxu0 0.0
        %1520 = vmatpush1.msra.mxu0 0.0
        %1521 = vmatprep.subr.mxu0 0.0
        %1522 = vmatpush1.msra.mxu0 0.0
        %1523 = vmatprep.subr.mxu0 0.0
        %1524 = vmatpush1.msra.mxu0 0.0
        %1525 = vmatprep.subr.mxu0 0.0
        %1526 = vmatpush1.msra.mxu0 0.0
        %1527 = vmatprep.subr.mxu0 0.0
        %1528 = vmatpush1.msra.mxu0 0.0
        %1529 = vmatprep.subr.mxu0 0.0
        %1530 = vmatpush1.msra.mxu0 0.0
        %1531 = vmatprep.subr.mxu0 0.0
        %1532 = vmatpush1.msra.mxu0 0.0
        %1533 = vmatprep.subr.mxu0 0.0
        %1534 = vmatpush1.msra.mxu0 0.0
        %1535 = vmatprep.subr.mxu0 0.0
        %1536 = vmatpush1.msra.mxu0 0.0
        %1537 = vmatprep.subr.mxu0 0.0
        %1538 = vmatpush1.msra.mxu0 0.0
        %1539 = vmatprep.subr.mxu0 0.0
        %1540 = vmatpush1.msra.mxu0 0.0
        %1541 = vmatprep.subr.mxu0 0.0
        %1542 = vmatpush1.msra.mxu0 0.0
        %1543 = vmatprep.subr.mxu0 0.0
        %1544 = vmatpush1.msra.mxu0 0.0
        %1545 = vmatprep.subr.mxu0 0.0
        %1546 = vmatpush1.msra.mxu0 0.0
        %1547 = vmatprep.subr.mxu0 0.0
        %1548 = vmatpush1.msra.mxu0 0.0
        %1549 = vmatprep.subr.mxu0 0.0
        %1550 = vmatpush1.msra.mxu0 0.0
        %1551 = vmatprep.subr.mxu0 0.0
        %1552 = vmatpush1.msra.mxu0 0.0
        %1553 = vmatprep.subr.mxu0 0.0
        %1554 = vmatpush1.msra.mxu0 0.0
        %1555 = vmatprep.subr.mxu0 0.0
        %1556 = vmatpush1.msra.mxu0 0.0
        %1557 = vmatprep.subr.mxu0 0.0
        %1558 = vmatpush1.msra.mxu0 0.0
        %1559 = vmatprep.subr.mxu0 0.0
        %1560 = vmatpush1.msra.mxu0 0.0
        %1561 = vmatprep.subr.mxu0 0.0
        %1562 = vmatpush1.msra.mxu0 0.0
        %1563 = vmatprep.subr.mxu0 0.0
        %1564 = vmatpush1.msra.mxu0 0.0
        %1565 = vmatprep.subr.mxu0 0.0
        %1566 = vmatpush1.msra.mxu0 0.0
        %1567 = vmatprep.mubr.f32.mxu0 0.0
        %1568 = vmatmul.mubr.f32.gmra.mrb[0].mxu0 %v1424
        %v1569 = vpop.f32.mrb[0].mxu0
        %v1570 = vadd.f32 0.0, %v1569
        %v1571 = vpop.f32.mrb[0].mxu0
        %1572 = vdwg.mxu0
        %v1575 = vsel %vm407, %v1402, 0
        %v1577 = vsel %vm411, %v1403, 0
        %v1579 = vsel %vm411, %v1410, 0
        %v1581 = vsel %vm411, %v1404, 0
        %1583 = vmatprep.subr.mxu0 %v1579
        %1584 = vmatpush1.msra.mxu0 %v1577
        %1585 = vmatprep.subr.mxu0 0.0
        %1586 = vmatpush1.msra.mxu0 0.0
        %1587 = vmatprep.subr.mxu0 0.0
        %1588 = vmatpush1.msra.mxu0 0.0
        %1589 = vmatprep.subr.mxu0 0.0
        %1590 = vmatpush1.msra.mxu0 0.0
        %1591 = vmatprep.subr.mxu0 0.0
        %1592 = vmatpush1.msra.mxu0 0.0
        %1593 = vmatprep.subr.mxu0 0.0
        %1594 = vmatpush1.msra.mxu0 0.0
        %1595 = vmatprep.subr.mxu0 0.0
        %1596 = vmatpush1.msra.mxu0 0.0
        %1597 = vmatprep.subr.mxu0 0.0
        %1598 = vmatpush1.msra.mxu0 0.0
        %1599 = vmatprep.subr.mxu0 0.0
        %1600 = vmatpush1.msra.mxu0 0.0
        %1601 = vmatprep.subr.mxu0 0.0
        %1602 = vmatpush1.msra.mxu0 0.0
        %1603 = vmatprep.subr.mxu0 0.0
        %1604 = vmatpush1.msra.mxu0 0.0
        %1605 = vmatprep.subr.mxu0 0.0
        %1606 = vmatpush1.msra.mxu0 0.0
        %1607 = vmatprep.subr.mxu0 0.0
        %1608 = vmatpush1.msra.mxu0 0.0
        %1609 = vmatprep.subr.mxu0 0.0
        %1610 = vmatpush1.msra.mxu0 0.0
        %1611 = vmatprep.subr.mxu0 0.0
        %1612 = vmatpush1.msra.mxu0 0.0
        %1613 = vmatprep.subr.mxu0 0.0
        %1614 = vmatpush1.msra.mxu0 0.0
        %1615 = vmatprep.subr.mxu0 0.0
        %1616 = vmatpush1.msra.mxu0 0.0
        %1617 = vmatprep.subr.mxu0 0.0
        %1618 = vmatpush1.msra.mxu0 0.0
        %1619 = vmatprep.subr.mxu0 0.0
        %1620 = vmatpush1.msra.mxu0 0.0
        %1621 = vmatprep.subr.mxu0 0.0
        %1622 = vmatpush1.msra.mxu0 0.0
        %1623 = vmatprep.subr.mxu0 0.0
        %1624 = vmatpush1.msra.mxu0 0.0
        %1625 = vmatprep.subr.mxu0 0.0
        %1626 = vmatpush1.msra.mxu0 0.0
        %1627 = vmatprep.subr.mxu0 0.0
        %1628 = vmatpush1.msra.mxu0 0.0
        %1629 = vmatprep.subr.mxu0 0.0
        %1630 = vmatpush1.msra.mxu0 0.0
        %1631 = vmatprep.subr.mxu0 0.0
        %1632 = vmatpush1.msra.mxu0 0.0
        %1633 = vmatprep.subr.mxu0 0.0
        %1634 = vmatpush1.msra.mxu0 0.0
        %1635 = vmatprep.subr.mxu0 0.0
        %1636 = vmatpush1.msra.mxu0 0.0
        %1637 = vmatprep.subr.mxu0 0.0
        %1638 = vmatpush1.msra.mxu0 0.0
        %1639 = vmatprep.subr.mxu0 0.0
        %1640 = vmatpush1.msra.mxu0 0.0
        %1641 = vmatprep.subr.mxu0 0.0
        %1642 = vmatpush1.msra.mxu0 0.0
        %1643 = vmatprep.subr.mxu0 0.0
        %1644 = vmatpush1.msra.mxu0 0.0
        %1645 = vmatprep.subr.mxu0 0.0
        %1646 = vmatpush1.msra.mxu0 0.0
        %1647 = vmatprep.mubr.f32.mxu0 0.0
        %1648 = vmatmul.mubr.f32.gmra.mrb[0].mxu0 %v1575
        %v1649 = vpop.f32.mrb[0].mxu0
        %v1650 = vadd.f32 %v1499, %v1649
        %v1651 = vpop.f32.mrb[0].mxu0
        %v1652 = vadd.f32 %v1501, %v1651
        %1653 = vdwg.mxu0
        %1654 = vmatprep.subr.mxu0 0.0
        %1655 = vmatpush1.msra.mxu0 %v1581
        %1656 = vmatprep.subr.mxu0 0.0
        %1657 = vmatpush1.msra.mxu0 0.0
        %1658 = vmatprep.subr.mxu0 0.0
        %1659 = vmatpush1.msra.mxu0 0.0
        %1660 = vmatprep.subr.mxu0 0.0
        %1661 = vmatpush1.msra.mxu0 0.0
        %1662 = vmatprep.subr.mxu0 0.0
        %1663 = vmatpush1.msra.mxu0 0.0
        %1664 = vmatprep.subr.mxu0 0.0
        %1665 = vmatpush1.msra.mxu0 0.0
        %1666 = vmatprep.subr.mxu0 0.0
        %1667 = vmatpush1.msra.mxu0 0.0
        %1668 = vmatprep.subr.mxu0 0.0
        %1669 = vmatpush1.msra.mxu0 0.0
        %1670 = vmatprep.subr.mxu0 0.0
        %1671 = vmatpush1.msra.mxu0 0.0
        %1672 = vmatprep.subr.mxu0 0.0
        %1673 = vmatpush1.msra.mxu0 0.0
        %1674 = vmatprep.subr.mxu0 0.0
        %1675 = vmatpush1.msra.mxu0 0.0
        %1676 = vmatprep.subr.mxu0 0.0
        %1677 = vmatpush1.msra.mxu0 0.0
        %1678 = vmatprep.subr.mxu0 0.0
        %1679 = vmatpush1.msra.mxu0 0.0
        %1680 = vmatprep.subr.mxu0 0.0
        %1681 = vmatpush1.msra.mxu0 0.0
        %1682 = vmatprep.subr.mxu0 0.0
        %1683 = vmatpush1.msra.mxu0 0.0
        %1684 = vmatprep.subr.mxu0 0.0
        %1685 = vmatpush1.msra.mxu0 0.0
        %1686 = vmatprep.subr.mxu0 0.0
        %1687 = vmatpush1.msra.mxu0 0.0
        %1688 = vmatprep.subr.mxu0 0.0
        %1689 = vmatpush1.msra.mxu0 0.0
        %1690 = vmatprep.subr.mxu0 0.0
        %1691 = vmatpush1.msra.mxu0 0.0
        %1692 = vmatprep.subr.mxu0 0.0
        %1693 = vmatpush1.msra.mxu0 0.0
        %1694 = vmatprep.subr.mxu0 0.0
        %1695 = vmatpush1.msra.mxu0 0.0
        %1696 = vmatprep.subr.mxu0 0.0
        %1697 = vmatpush1.msra.mxu0 0.0
        %1698 = vmatprep.subr.mxu0 0.0
        %1699 = vmatpush1.msra.mxu0 0.0
        %1700 = vmatprep.subr.mxu0 0.0
        %1701 = vmatpush1.msra.mxu0 0.0
        %1702 = vmatprep.subr.mxu0 0.0
        %1703 = vmatpush1.msra.mxu0 0.0
        %1704 = vmatprep.subr.mxu0 0.0
        %1705 = vmatpush1.msra.mxu0 0.0
        %1706 = vmatprep.subr.mxu0 0.0
        %1707 = vmatpush1.msra.mxu0 0.0
        %1708 = vmatprep.subr.mxu0 0.0
        %1709 = vmatpush1.msra.mxu0 0.0
        %1710 = vmatprep.subr.mxu0 0.0
        %1711 = vmatpush1.msra.mxu0 0.0
        %1712 = vmatprep.subr.mxu0 0.0
        %1713 = vmatpush1.msra.mxu0 0.0
        %1714 = vmatprep.subr.mxu0 0.0
        %1715 = vmatpush1.msra.mxu0 0.0
        %1716 = vmatprep.subr.mxu0 0.0
        %1717 = vmatpush1.msra.mxu0 0.0
        %1718 = vmatprep.mubr.f32.mxu0 0.0
        %1719 = vmatmul.mubr.f32.gmra.mrb[0].mxu0 %v1575
        %v1720 = vpop.f32.mrb[0].mxu0
        %v1721 = vadd.f32 %v1570, %v1720
        %v1722 = vpop.f32.mrb[0].mxu0
        %1723 = vdwg.mxu0
        %v1724 = vld [vmem:[%s6] sm:$0xff]
        %v1725 = vld [vmem:[%s380] sm:$0xff]
        %1727 = vset.pattern.permute.xlu0 0
        %1728 = vperm.xlu0 %1727, %v1725
        %v1729 = vpop.permute.xlu0 %1728
        %v1731 = vadd.f32 %v1399, %v1729
        %v1732 = vadd.f32 %v1400, %v1729
        %v1733 = vadd.f32 %v1401, %v1729
        %vm1734 = vcmask 64512
        %v1736 = vsel %vm1734, %v1724, 0
        %1738 = vmatprep.subr.mxu0 %v1400
        %1739 = vmatpush1.msra.mxu0 %v1399
        %1740 = vmatprep.subr.mxu0 0.0
        %1741 = vmatpush1.msra.mxu0 0.0
        %1742 = vmatprep.subr.mxu0 0.0
        %1743 = vmatpush1.msra.mxu0 0.0
        %1744 = vmatprep.subr.mxu0 0.0
        %1745 = vmatpush1.msra.mxu0 0.0
        %1746 = vmatprep.subr.mxu0 0.0
        %1747 = vmatpush1.msra.mxu0 0.0
        %1748 = vmatprep.subr.mxu0 0.0
        %1749 = vmatpush1.msra.mxu0 0.0
        %1750 = vmatprep.subr.mxu0 0.0
        %1751 = vmatpush1.msra.mxu0 0.0
        %1752 = vmatprep.subr.mxu0 0.0
        %1753 = vmatpush1.msra.mxu0 0.0
        %1754 = vmatprep.subr.mxu0 0.0
        %1755 = vmatpush1.msra.mxu0 0.0
        %1756 = vmatprep.subr.mxu0 0.0
        %1757 = vmatpush1.msra.mxu0 0.0
        %1758 = vmatprep.subr.mxu0 0.0
        %1759 = vmatpush1.msra.mxu0 0.0
        %1760 = vmatprep.subr.mxu0 0.0
        %1761 = vmatpush1.msra.mxu0 0.0
        %1762 = vmatprep.subr.mxu0 0.0
        %1763 = vmatpush1.msra.mxu0 0.0
        %1764 = vmatprep.subr.mxu0 0.0
        %1765 = vmatpush1.msra.mxu0 0.0
        %1766 = vmatprep.subr.mxu0 0.0
        %1767 = vmatpush1.msra.mxu0 0.0
        %1768 = vmatprep.subr.mxu0 0.0
        %1769 = vmatpush1.msra.mxu0 0.0
        %1770 = vmatprep.subr.mxu0 0.0
        %1771 = vmatpush1.msra.mxu0 0.0
        %1772 = vmatprep.subr.mxu0 0.0
        %1773 = vmatpush1.msra.mxu0 0.0
        %1774 = vmatprep.subr.mxu0 0.0
        %1775 = vmatpush1.msra.mxu0 0.0
        %1776 = vmatprep.subr.mxu0 0.0
        %1777 = vmatpush1.msra.mxu0 0.0
        %1778 = vmatprep.subr.mxu0 0.0
        %1779 = vmatpush1.msra.mxu0 0.0
        %1780 = vmatprep.subr.mxu0 0.0
        %1781 = vmatpush1.msra.mxu0 0.0
        %1782 = vmatprep.subr.mxu0 0.0
        %1783 = vmatpush1.msra.mxu0 0.0
        %1784 = vmatprep.subr.mxu0 0.0
        %1785 = vmatpush1.msra.mxu0 0.0
        %1786 = vmatprep.subr.mxu0 0.0
        %1787 = vmatpush1.msra.mxu0 0.0
        %1788 = vmatprep.subr.mxu0 0.0
        %1789 = vmatpush1.msra.mxu0 0.0
        %1790 = vmatprep.subr.mxu0 0.0
        %1791 = vmatpush1.msra.mxu0 0.0
        %1792 = vmatprep.subr.mxu0 0.0
        %1793 = vmatpush1.msra.mxu0 0.0
        %1794 = vmatprep.subr.mxu0 0.0
        %1795 = vmatpush1.msra.mxu0 0.0
        %1796 = vmatprep.subr.mxu0 0.0
        %1797 = vmatpush1.msra.mxu0 0.0
        %1798 = vmatprep.subr.mxu0 0.0
        %1799 = vmatpush1.msra.mxu0 0.0
        %1800 = vmatprep.subr.mxu0 0.0
        %1801 = vmatpush1.msra.mxu0 0.0
        %1802 = vmatprep.mubr.f32.mxu0 0.0
        %1803 = vmatmul.mubr.f32.gmra.mrb[0].mxu0 %v1736
        %v1804 = vpop.f32.mrb[0].mxu0
        %v1805 = vadd.f32 %v1650, %v1804
        %v1806 = vpop.f32.mrb[0].mxu0
        %v1807 = vadd.f32 %v1652, %v1806
        %1808 = vdwg.mxu0
        %1809 = vmatprep.subr.mxu0 0.0
        %1810 = vmatpush1.msra.mxu0 %v1401
        %1811 = vmatprep.subr.mxu0 0.0
        %1812 = vmatpush1.msra.mxu0 0.0
        %1813 = vmatprep.subr.mxu0 0.0
        %1814 = vmatpush1.msra.mxu0 0.0
        %1815 = vmatprep.subr.mxu0 0.0
        %1816 = vmatpush1.msra.mxu0 0.0
        %1817 = vmatprep.subr.mxu0 0.0
        %1818 = vmatpush1.msra.mxu0 0.0
        %1819 = vmatprep.subr.mxu0 0.0
        %1820 = vmatpush1.msra.mxu0 0.0
        %1821 = vmatprep.subr.mxu0 0.0
        %1822 = vmatpush1.msra.mxu0 0.0
        %1823 = vmatprep.subr.mxu0 0.0
        %1824 = vmatpush1.msra.mxu0 0.0
        %1825 = vmatprep.subr.mxu0 0.0
        %1826 = vmatpush1.msra.mxu0 0.0
        %1827 = vmatprep.subr.mxu0 0.0
        %1828 = vmatpush1.msra.mxu0 0.0
        %1829 = vmatprep.subr.mxu0 0.0
        %1830 = vmatpush1.msra.mxu0 0.0
        %1831 = vmatprep.subr.mxu0 0.0
        %1832 = vmatpush1.msra.mxu0 0.0
        %1833 = vmatprep.subr.mxu0 0.0
        %1834 = vmatpush1.msra.mxu0 0.0
        %1835 = vmatprep.subr.mxu0 0.0
        %1836 = vmatpush1.msra.mxu0 0.0
        %1837 = vmatprep.subr.mxu0 0.0
        %1838 = vmatpush1.msra.mxu0 0.0
        %1839 = vmatprep.subr.mxu0 0.0
        %1840 = vmatpush1.msra.mxu0 0.0
        %1841 = vmatprep.subr.mxu0 0.0
        %1842 = vmatpush1.msra.mxu0 0.0
        %1843 = vmatprep.subr.mxu0 0.0
        %1844 = vmatpush1.msra.mxu0 0.0
        %1845 = vmatprep.subr.mxu0 0.0
        %1846 = vmatpush1.msra.mxu0 0.0
        %1847 = vmatprep.subr.mxu0 0.0
        %1848 = vmatpush1.msra.mxu0 0.0
        %1849 = vmatprep.subr.mxu0 0.0
        %1850 = vmatpush1.msra.mxu0 0.0
        %1851 = vmatprep.subr.mxu0 0.0
        %1852 = vmatpush1.msra.mxu0 0.0
        %1853 = vmatprep.subr.mxu0 0.0
        %1854 = vmatpush1.msra.mxu0 0.0
        %1855 = vmatprep.subr.mxu0 0.0
        %1856 = vmatpush1.msra.mxu0 0.0
        %1857 = vmatprep.subr.mxu0 0.0
        %1858 = vmatpush1.msra.mxu0 0.0
        %1859 = vmatprep.subr.mxu0 0.0
        %1860 = vmatpush1.msra.mxu0 0.0
        %1861 = vmatprep.subr.mxu0 0.0
        %1862 = vmatpush1.msra.mxu0 0.0
        %1863 = vmatprep.subr.mxu0 0.0
        %1864 = vmatpush1.msra.mxu0 0.0
        %1865 = vmatprep.subr.mxu0 0.0
        %1866 = vmatpush1.msra.mxu0 0.0
        %1867 = vmatprep.subr.mxu0 0.0
        %1868 = vmatpush1.msra.mxu0 0.0
        %1869 = vmatprep.subr.mxu0 0.0
        %1870 = vmatpush1.msra.mxu0 0.0
        %1871 = vmatprep.subr.mxu0 0.0
        %1872 = vmatpush1.msra.mxu0 0.0
        %1873 = vmatprep.mubr.f32.mxu0 0.0
        %1874 = vmatmul.mubr.f32.gmra.mrb[0].mxu0 %v1736
        %v1875 = vpop.f32.mrb[0].mxu0
        %v1876 = vadd.f32 %v1721, %v1875
        %v1877 = vpop.f32.mrb[0].mxu0
        %1878 = vdwg.mxu0
        %v1879 = vld [vmem:[%s384] sm:$0xff]
        %1881 = vset.pattern.permute.xlu0 0
        %1882 = vperm.xlu0 %1881, %v1879
        %v1883 = vpop.permute.xlu0 %1882
        %v1885 = vadd.f32 %v1805, %v1883
        %v1886 = vadd.f32 %v1807, %v1883
        %v1887 = vadd.f32 %v1876, %v1883
        %v1888 = vtanh.pop %v1731
        %v1889 = vtanh.pop %v1732
        %v1890 = vtanh.pop %v1733
        %v1891 = vmul.f32 %v1731, 0.5
        %v1892 = vmul.f32 %v1732, 0.5
        %v1893 = vmul.f32 %v1733, 0.5
        %v1894 = vtanh.pop %v1891
        %v1895 = vtanh.pop %v1892
        %v1896 = vtanh.pop %v1893
        %v1897 = vadd.f32 %v1894, 1.0
        %v1898 = vadd.f32 %v1895, 1.0
        %v1899 = vadd.f32 %v1896, 1.0
        %v1900 = vmul.f32 %v1897, 0.5
        %v1901 = vmul.f32 %v1898, 0.5
        %v1902 = vmul.f32 %v1899, 0.5
        %v1906 = vrot.slane %v1900, 4
        %v1907 = vrot.slane %v1901, 4
        %v1908 = vrot.slane %v1902, 4
        %v1912 = vmul.f32 %v1888, %v1906
        %v1913 = vmul.f32 %v1889, %v1907
        %v1914 = vmul.f32 %v1890, %v1908
        %v1915 = vtanh.pop %v1885
        %v1916 = vtanh.pop %v1886
        %v1917 = vtanh.pop %v1887
        %v1918 = vmul.f32 %v1885, 0.5
        %v1919 = vmul.f32 %v1886, 0.5
        %v1920 = vmul.f32 %v1887, 0.5
        %v1921 = vtanh.pop %v1918
        %v1922 = vtanh.pop %v1919
        %v1923 = vtanh.pop %v1920
        %v1924 = vadd.f32 %v1921, 1.0
        %v1925 = vadd.f32 %v1922, 1.0
        %v1926 = vadd.f32 %v1923, 1.0
        %v1927 = vmul.f32 %v1924, 0.5
        %v1928 = vmul.f32 %v1925, 0.5
        %v1929 = vmul.f32 %v1926, 0.5
        %v1933 = vrot.slane %v1927, 4
        %v1934 = vrot.slane %v1928, 4
        %v1935 = vrot.slane %v1929, 4
        %v1939 = vmul.f32 %v1915, %v1933
        %v1940 = vmul.f32 %v1916, %v1934
        %v1941 = vmul.f32 %v1917, %v1935
        %v1942 = vld [vmem:[%s7] sm:$0xf]
        %v1943 = vld [vmem:[%s8] sm:$0xf]
        %1945 = vset.pattern.permute.xlu0 0
        %1946 = vperm.xlu0 %1945, %v1943
        %v1947 = vpop.permute.xlu0 %1946
        %v1950 = vsel %vm407, %v1942, 0
        %v1953 = vsel %vm411, %v1939, 0
        %v1956 = vsel %vm411, %v1940, 0
        %v1959 = vsel %vm411, %v1941, 0
        %1961 = vmatprep.subr.mxu0 %v1956
        %1962 = vmatpush1.msra.mxu0 %v1953
        %1963 = vmatprep.subr.mxu0 0.0
        %1964 = vmatpush1.msra.mxu0 0.0
        %1965 = vmatprep.subr.mxu0 0.0
        %1966 = vmatpush1.msra.mxu0 0.0
        %1967 = vmatprep.subr.mxu0 0.0
        %1968 = vmatpush1.msra.mxu0 0.0
        %1969 = vmatprep.subr.mxu0 0.0
        %1970 = vmatpush1.msra.mxu0 0.0
        %1971 = vmatprep.subr.mxu0 0.0
        %1972 = vmatpush1.msra.mxu0 0.0
        %1973 = vmatprep.subr.mxu0 0.0
        %1974 = vmatpush1.msra.mxu0 0.0
        %1975 = vmatprep.subr.mxu0 0.0
        %1976 = vmatpush1.msra.mxu0 0.0
        %1977 = vmatprep.subr.mxu0 0.0
        %1978 = vmatpush1.msra.mxu0 0.0
        %1979 = vmatprep.subr.mxu0 0.0
        %1980 = vmatpush1.msra.mxu0 0.0
        %1981 = vmatprep.subr.mxu0 0.0
        %1982 = vmatpush1.msra.mxu0 0.0
        %1983 = vmatprep.subr.mxu0 0.0
        %1984 = vmatpush1.msra.mxu0 0.0
        %1985 = vmatprep.subr.mxu0 0.0
        %1986 = vmatpush1.msra.mxu0 0.0
        %1987 = vmatprep.subr.mxu0 0.0
        %1988 = vmatpush1.msra.mxu0 0.0
        %1989 = vmatprep.subr.mxu0 0.0
        %1990 = vmatpush1.msra.mxu0 0.0
        %1991 = vmatprep.subr.mxu0 0.0
        %1992 = vmatpush1.msra.mxu0 0.0
        %1993 = vmatprep.subr.mxu0 0.0
        %1994 = vmatpush1.msra.mxu0 0.0
        %1995 = vmatprep.subr.mxu0 0.0
        %1996 = vmatpush1.msra.mxu0 0.0
        %1997 = vmatprep.subr.mxu0 0.0
        %1998 = vmatpush1.msra.mxu0 0.0
        %1999 = vmatprep.subr.mxu0 0.0
        %2000 = vmatpush1.msra.mxu0 0.0
        %2001 = vmatprep.subr.mxu0 0.0
        %2002 = vmatpush1.msra.mxu0 0.0
        %2003 = vmatprep.subr.mxu0 0.0
        %2004 = vmatpush1.msra.mxu0 0.0
        %2005 = vmatprep.subr.mxu0 0.0
        %2006 = vmatpush1.msra.mxu0 0.0
        %2007 = vmatprep.subr.mxu0 0.0
        %2008 = vmatpush1.msra.mxu0 0.0
        %2009 = vmatprep.subr.mxu0 0.0
        %2010 = vmatpush1.msra.mxu0 0.0
        %2011 = vmatprep.subr.mxu0 0.0
        %2012 = vmatpush1.msra.mxu0 0.0
        %2013 = vmatprep.subr.mxu0 0.0
        %2014 = vmatpush1.msra.mxu0 0.0
        %2015 = vmatprep.subr.mxu0 0.0
        %2016 = vmatpush1.msra.mxu0 0.0
        %2017 = vmatprep.subr.mxu0 0.0
        %2018 = vmatpush1.msra.mxu0 0.0
        %2019 = vmatprep.subr.mxu0 0.0
        %2020 = vmatpush1.msra.mxu0 0.0
        %2021 = vmatprep.subr.mxu0 0.0
        %2022 = vmatpush1.msra.mxu0 0.0
        %2023 = vmatprep.subr.mxu0 0.0
        %2024 = vmatpush1.msra.mxu0 0.0
        %2025 = vmatprep.mubr.f32.mxu0 0.0
        %2026 = vmatmul.mubr.f32.gmra.mrb[0].mxu0 %v1950
        %v2027 = vpop.f32.mrb[0].mxu0
        %v2028 = vadd.f32 %v1947, %v2027
        %v2029 = vpop.f32.mrb[0].mxu0
        %v2030 = vadd.f32 %v1947, %v2029
        %2031 = vdwg.mxu0
        %2032 = vmatprep.subr.mxu0 0.0
        %2033 = vmatpush1.msra.mxu0 %v1959
        %2034 = vmatprep.subr.mxu0 0.0
        %2035 = vmatpush1.msra.mxu0 0.0
        %2036 = vmatprep.subr.mxu0 0.0
        %2037 = vmatpush1.msra.mxu0 0.0
        %2038 = vmatprep.subr.mxu0 0.0
        %2039 = vmatpush1.msra.mxu0 0.0
        %2040 = vmatprep.subr.mxu0 0.0
        %2041 = vmatpush1.msra.mxu0 0.0
        %2042 = vmatprep.subr.mxu0 0.0
        %2043 = vmatpush1.msra.mxu0 0.0
        %2044 = vmatprep.subr.mxu0 0.0
        %2045 = vmatpush1.msra.mxu0 0.0
        %2046 = vmatprep.subr.mxu0 0.0
        %2047 = vmatpush1.msra.mxu0 0.0
        %2048 = vmatprep.subr.mxu0 0.0
        %2049 = vmatpush1.msra.mxu0 0.0
        %2050 = vmatprep.subr.mxu0 0.0
        %2051 = vmatpush1.msra.mxu0 0.0
        %2052 = vmatprep.subr.mxu0 0.0
        %2053 = vmatpush1.msra.mxu0 0.0
        %2054 = vmatprep.subr.mxu0 0.0
        %2055 = vmatpush1.msra.mxu0 0.0
        %2056 = vmatprep.subr.mxu0 0.0
        %2057 = vmatpush1.msra.mxu0 0.0
        %2058 = vmatprep.subr.mxu0 0.0
        %2059 = vmatpush1.msra.mxu0 0.0
        %2060 = vmatprep.subr.mxu0 0.0
        %2061 = vmatpush1.msra.mxu0 0.0
        %2062 = vmatprep.subr.mxu0 0.0
        %2063 = vmatpush1.msra.mxu0 0.0
        %2064 = vmatprep.subr.mxu0 0.0
        %2065 = vmatpush1.msra.mxu0 0.0
        %2066 = vmatprep.subr.mxu0 0.0
        %2067 = vmatpush1.msra.mxu0 0.0
        %2068 = vmatprep.subr.mxu0 0.0
        %2069 = vmatpush1.msra.mxu0 0.0
        %2070 = vmatprep.subr.mxu0 0.0
        %2071 = vmatpush1.msra.mxu0 0.0
        %2072 = vmatprep.subr.mxu0 0.0
        %2073 = vmatpush1.msra.mxu0 0.0
        %2074 = vmatprep.subr.mxu0 0.0
        %2075 = vmatpush1.msra.mxu0 0.0
        %2076 = vmatprep.subr.mxu0 0.0
        %2077 = vmatpush1.msra.mxu0 0.0
        %2078 = vmatprep.subr.mxu0 0.0
        %2079 = vmatpush1.msra.mxu0 0.0
        %2080 = vmatprep.subr.mxu0 0.0
        %2081 = vmatpush1.msra.mxu0 0.0
        %2082 = vmatprep.subr.mxu0 0.0
        %2083 = vmatpush1.msra.mxu0 0.0
        %2084 = vmatprep.subr.mxu0 0.0
        %2085 = vmatpush1.msra.mxu0 0.0
        %2086 = vmatprep.subr.mxu0 0.0
        %2087 = vmatpush1.msra.mxu0 0.0
        %2088 = vmatprep.subr.mxu0 0.0
        %2089 = vmatpush1.msra.mxu0 0.0
        %2090 = vmatprep.subr.mxu0 0.0
        %2091 = vmatpush1.msra.mxu0 0.0
        %2092 = vmatprep.subr.mxu0 0.0
        %2093 = vmatpush1.msra.mxu0 0.0
        %2094 = vmatprep.subr.mxu0 0.0
        %2095 = vmatpush1.msra.mxu0 0.0
        %2096 = vmatprep.mubr.f32.mxu0 0.0
        %2097 = vmatmul.mubr.f32.gmra.mrb[0].mxu0 %v1950
        %v2098 = vpop.f32.mrb[0].mxu0
        %v2099 = vadd.f32 %v1947, %v2098
        %v2100 = vpop.f32.mrb[0].mxu0
        %2101 = vdwg.mxu0
        %v2105 = vadd.f32 %v2028, %v1420
        %v2106 = vadd.f32 %v2030, %v1421
        %v2107 = vadd.f32 %v2099, %v1422
        %2108 = vst [vmem:[%s366] sm:$0xf] %v1912
        %2109 = vst [vmem:[%s366 + $0x8] sm:$0xf] %v1913
        %2110 = vst [vmem:[%s366 + $0x10] sm:$0xf] %v1914
        %v2114 = vrot.slane %v2105, 4
        %v2115 = vrot.slane %v2106, 4
        %v2116 = vrot.slane %v2107, 4
        %2120 = vst [vmem:[%s366] sm:$0xf0] %v2114
        %2121 = vst [vmem:[%s366 + $0x8] sm:$0xf0] %v2115
        %2122 = vst [vmem:[%s366 + $0x10] sm:$0xf0] %v2116
        %s2123 = sand.u32 %s240, 1
        %s2124 = scalar_lea.sflag [#allocation3], %s2123
        %s2125 = sand.u32 %s240, 1
        %s2126 = smul.addr %s2125, 24
        %s2127 = scalar_lea.vmem [#allocation2], %s2126
        // Predicated region
        $region57: #{tpu_custom_call.1} parent=55 // pred_check
          %p2128 = pneg %p250
        $region58: #{tpu_custom_call.1} parent=55 // pred_check_branch
          %2130 = sbr.rel (%p2128) target = $region60
        $region59: #{tpu_custom_call.1} parent=55 // pred_region
          %s2132 = ssub.s32 384, 384
          %2133 = vsyncadd %s2124, %s2132
          %s2134 = smul.addr %s23, 3
          %s2135 = smul.addr %s2134, 128
          %s2136 = scalar_lea.hbm %s9, %s2135
          %s2138 = sshll.u32 %s2127, 4
          %s2139 = int_to_ptr.vmem [resolvable:$true] %s2138
          %2141 = dma.vmem_to_hbm [thread:$0]  %s2139, 384, %s2136, %s2124
        $region60: #{tpu_custom_call.1} parent=55 // pred_fallthru
          _
      $region56: #{tpu_custom_call.1} parent=5 // pred_fallthru
        _
      %p2142 = scmp.le.s32.totalorder 2, %s18
      // Predicated region
      $region61: #{tpu_custom_call.1} parent=5 // pred_check
        %p2143 = pneg %p2142
      $region62: #{tpu_custom_call.1} parent=5 // pred_check_branch
        %2145 = sbr.rel (%p2143) target = $region64
      $region63: #{tpu_custom_call.1} parent=5 // pred_region
        %s2146 = ssub.s32 %s18, 2
        // Predicated region
        $region65: #{tpu_custom_call.1} parent=63 // pred_check
          %p2147 = pneg %p256
        $region66: #{tpu_custom_call.1} parent=63 // pred_check_branch
          %2149 = sbr.rel (%p2147) target = $region68
        $region67: #{tpu_custom_call.1} parent=63 // pred_region
          %s2150 = sand.u32 %s241, 1
          %s2151 = scalar_lea.sflag [#allocation3], %s2150
          %s2152 = sand.u32 %s241, 1
          %s2153 = smul.addr %s2152, 24
          %s2154 = scalar_lea.vmem [#allocation2], %s2153
          %2155 = dma.done %s2151, 384
        $region68: #{tpu_custom_call.1} parent=63 // pred_fallthru
          _
      $region64: #{tpu_custom_call.1} parent=5 // pred_fallthru
        _
    $region6: #{tpu_custom_call.1} parent=1 // loop_footer
      %s22 = sadd.s32 1, %s18
    $region7: #{tpu_custom_call.1} parent=1 // loop_footer_branch
      %17 = sbr.rel target = $region3
    $region8: #{tpu_custom_call.1} parent=1 // loop_exit
      _
    %2156 = vsyncpa [#allocation3], 1
    %s2157 = scalar_lea.sflag [#allocation3], 1
    %2158 = vsyncpa %s2157, 1

</llo_original>
